<compile_context>
chip_gen: v7x
topology: tpu7x:2x2x1
jax: 0.10.0
libtpu: 0.0.40
codegen_flags: <defaults>
</compile_context>

<pallas_src>
import functools

import jax
import jax.numpy as jnp
from jax.experimental import pallas as pl
from jax.experimental.pallas import tpu as pltpu


def _round_up(x, m):
    return -(-x // m) * m


def _siamese_lstm_kernel(ids_ref, table_ref, whh_ref, hc0_ref, out_ref,
                         h_scr, c_scr, gx_scr, *,
                         seq_len, chunk, hidden, vocab):
    """One (batch-block, sequence-chunk) grid step of the fused siamese LSTM.

    ids_ref  : (1, chunk, BH) int32  token ids for this encoder block / chunk
    table_ref: (V, 4H)        bf16   embedding @ W_ih^T + (b_ih + b_hh)
    whh_ref  : (H, 4H)        bf16   recurrent weight, transposed
    hc0_ref  : (1, 2, BH, H)  f32    initial h0 / c0 for this encoder block
    out_ref  : (1, BH, H)     f32    final hidden state h_S
    h_scr/c_scr: (BH, H)      f32    recurrent state, persists across chunks
    gx_scr   : (chunk, BH, 4H) f32   per-chunk x-projection
    """
    H = hidden
    s = pl.program_id(1)

    @pl.when(s == 0)
    def _init_state():
        h_scr[...] = hc0_ref[0, 0]
        c_scr[...] = hc0_ref[0, 1]

    # ---- x-projection for the whole chunk (independent of h -> off the
    # serial critical path).  In-kernel gather: one-hot(ids) @ gate_table on
    # the otherwise-idle MXU.  one-hot entries are exactly 0/1 in bf16, so
    # this reproduces the gather bit-exactly with f32 accumulation.
    ids = ids_ref[0]                                             # (chunk, BH)
    T, BH = ids.shape
    onehot = (ids[:, :, None] ==
              jax.lax.broadcasted_iota(jnp.int32, (T, BH, vocab), 2))
    onehot = onehot.astype(jnp.float32).astype(table_ref.dtype)  # (T, BH, V)
    gx = jnp.dot(onehot.reshape(T * BH, vocab), table_ref[...],
                 preferred_element_type=jnp.float32)             # (T*BH, 4H)
    gx_scr[...] = gx.reshape(T, BH, 4 * H)

    whh = whh_ref[...]                                           # (H, 4H) bf16

    # Hoisted once per chunk: lane mask selecting the tanh (cell/"g") gate.
    full_width_act = (H % 128) != 0
    if full_width_act:
        lane = jax.lax.broadcasted_iota(jnp.int32, (BH, 4 * H), 1)
        g_lane = (lane >= 2 * H) & (lane < 3 * H)

    needs_mask = (seq_len % chunk) != 0
    base_t = s * chunk

    def step(t, carry):
        h, c = carry
        # Only the h-dependent half of the gate pre-activation is serial.
        gates = gx_scr[t] + jnp.dot(h.astype(whh.dtype), whh,
                                    preferred_element_type=jnp.float32)
        if full_width_act:
            # Full-width sigmoid + tanh + lane select: fewer EUP passes and no
            # intra-vreg lane extraction when H < 128.
            act = jnp.where(g_lane, jnp.tanh(gates), jax.nn.sigmoid(gates))
            i_g = act[:, 0 * H:1 * H]
            f_g = act[:, 1 * H:2 * H]
            g_g = act[:, 2 * H:3 * H]
            o_g = act[:, 3 * H:4 * H]
        else:
            # PyTorch nn.LSTM gate order: input, forget, cell(g), output.
            i_g = jax.nn.sigmoid(gates[:, 0 * H:1 * H])
            f_g = jax.nn.sigmoid(gates[:, 1 * H:2 * H])
            g_g = jnp.tanh(gates[:, 2 * H:3 * H])
            o_g = jax.nn.sigmoid(gates[:, 3 * H:4 * H])
        c_new = f_g * c + i_g * g_g
        h_new = o_g * jnp.tanh(c_new)
        if needs_mask:   # padded timesteps (past seq_len) leave state untouched
            valid = (base_t + t) < seq_len
            h_new = jnp.where(valid, h_new, h)
            c_new = jnp.where(valid, c_new, c)
        return h_new, c_new

    h, c = jax.lax.fori_loop(0, chunk, step, (h_scr[...], c_scr[...]),
                             unroll=min(chunk, 8))
    h_scr[...] = h
    c_scr[...] = c

    @pl.when(s == pl.num_programs(1) - 1)
    def _write_out():
        out_ref[0] = h


@functools.partial(jax.jit, static_argnames=("seq_len", "chunk"))
def siamese_lstm_final_hidden(gate_table, w_hh_t, ids_blocks, hc0_blocks, *,
                              seq_len, chunk):
    """Runs the shared-weight LSTM over both encoder blocks.

    gate_table: (V, 4H) bf16, w_hh_t: (H, 4H) bf16,
    ids_blocks: (2, S_pad, BH) int32, hc0_blocks: (2, 2, BH, H) f32.
    Returns the final hidden states, shape (2, BH, H) f32.
    """
    nb, s_pad, bh = ids_blocks.shape
    v, g = gate_table.shape
    hdim = hc0_blocks.shape[-1]
    assert g == 4 * hdim and s_pad % chunk == 0
    num_chunks = s_pad // chunk

    kernel = functools.partial(_siamese_lstm_kernel, seq_len=seq_len,
                               chunk=chunk, hidden=hdim, vocab=v)

    # Explicit VMEM budget (kept well under v7x's 64 MiB physical VMEM).
    est = (2 * (v * g + hdim * g) * 2                   # table + W_hh (bf16, x2 buf)
           + 2 * chunk * bh * 4                         # ids chunk, double-buffered
           + 2 * 2 * bh * hdim * 4 + 2 * bh * hdim * 4  # hc0 + out blocks
           + (2 * bh * hdim + chunk * bh * g) * 4       # h/c/gx scratch
           + chunk * bh * v * 4)                        # one-hot temporaries
    vmem_limit = int(min(max(4 * est, 32 * 1024 * 1024), 64 * 1024 * 1024))

    return pl.pallas_call(
        kernel,
        out_shape=jax.ShapeDtypeStruct((nb, bh, hdim), jnp.float32),
        grid=(nb, num_chunks),
        in_specs=[
            # Streamed per chunk; the only O(S) HBM traffic.
            pl.BlockSpec((1, chunk, bh), lambda b, s: (b, s, 0)),
            # Loop-invariant operands, constant index_map -> fetched once.
            # TODO(synk): at production vocab sizes pass the gate table with
            # memory_space=pl.ANY and row-gather via make_async_copy instead
            # of keeping the full table (double-buffered) in VMEM.
            pl.BlockSpec((v, g), lambda b, s: (0, 0)),
            pl.BlockSpec((hdim, g), lambda b, s: (0, 0)),
            pl.BlockSpec((1, 2, bh, hdim), lambda b, s: (b, 0, 0, 0)),
        ],
        out_specs=pl.BlockSpec((1, bh, hdim), lambda b, s: (b, 0, 0)),
        scratch_shapes=[
            pltpu.VMEM((bh, hdim), jnp.float32),          # h state
            pltpu.VMEM((bh, hdim), jnp.float32),          # c state
            pltpu.VMEM((chunk, bh, g), jnp.float32),      # per-chunk gates_x
        ],
        compiler_params=pltpu.CompilerParams(
            dimension_semantics=("parallel", "arbitrary"),
            vmem_limit_bytes=vmem_limit),
    )(ids_blocks, gate_table, w_hh_t, hc0_blocks)


class SiameseClassifierJAX:
    """JAX/Pallas port of SiameseClassifier.forward (shared-weight encoders)."""

    def __init__(self, vocab_size, embedding_dims, hidden_dims, batch_size,
                 key, seq_chunk=8):
        self.vocab_size = vocab_size
        self.embedding_dims = embedding_dims
        self.hidden_dims = hidden_dims
        self.batch_size = batch_size
        # Per-encoder batch block padded to full 8-sublane tiles; the two
        # encoder blocks form the leading "parallel" grid axis.
        self.block_batch = _round_up(max(batch_size, 1), 8)
        # Sequence chunk streamed per grid step (multiple of 8 sublanes).
        self.seq_chunk = _round_up(max(seq_chunk, 1), 8)

        k_emb, k_wih, k_whh, k_bih, k_bhh, self._hidden_key = jax.random.split(key, 6)
        E, H, V = embedding_dims, hidden_dims, vocab_size

        # xavier_normal: std = sqrt(2 / (fan_in + fan_out)) from the 2-D shape.
        def xavier_normal(k, shape):
            fan_out, fan_in = shape
            std = jnp.sqrt(2.0 / (fan_in + fan_out))
            return std * jax.random.normal(k, shape, dtype=jnp.float32)

        # Embedding table (pretrained_embeddings is itself a xavier_normal draw).
        self.embedding = xavier_normal(k_emb, (V, E))

        # LSTM weights, PyTorch shapes (4H, E) / (4H, H), xavier_normal init.
        w_ih = xavier_normal(k_wih, (4 * H, E))
        w_hh = xavier_normal(k_whh, (4 * H, H))

        # Biases: PyTorch default uniform(-1/sqrt(H), 1/sqrt(H));
        # initialize_parameters() then fills the [H:2H] slice of BOTH bias
        # vectors with 2.5, so the combined forget-gate bias is 5.0 -- faithful
        # to the original module.
        bound = 1.0 / jnp.sqrt(jnp.float32(H))
        b_ih = jax.random.uniform(k_bih, (4 * H,), jnp.float32, -bound, bound)
        b_hh = jax.random.uniform(k_bhh, (4 * H,), jnp.float32, -bound, bound)
        b_ih = b_ih.at[H:2 * H].set(2.5)
        b_hh = b_hh.at[H:2 * H].set(2.5)

        # Hoisted input projection: emb(x) @ W_ih^T + b == gate_table[x].
        # Stored bf16 (dominant VMEM consumer); the MXU accumulates in f32.
        gate_table = self.embedding @ w_ih.T + (b_ih + b_hh)[None, :]
        self.gate_table = gate_table.astype(jnp.bfloat16)        # (V, 4H)
        self.w_hh_t = w_hh.T.astype(jnp.bfloat16)                 # (H, 4H)

    def _init_hidden(self, key):
        # Mirrors LSTMEncoder.initHidden(): fresh randn h0 / c0 per encoder.
        kh, kc = jax.random.split(key)
        shape = (self.batch_size, self.hidden_dims)
        return (jax.random.normal(kh, shape, jnp.float32),
                jax.random.normal(kc, shape, jnp.float32))

    def forward(self, x1, x2, y=None, key=None):
        """x1, x2: int32 token ids of shape (S, B). Returns (enc_a, enc_b)."""
        del y  # labels only feed get_loss()/get_accuracy(), not the encodings
        S, B = x1.shape
        assert x2.shape == (S, B) and B == self.batch_size
        BH, T = self.block_batch, self.seq_chunk
        s_pad = _round_up(S, T)

        # Fresh random h0/c0 per forward call, like torch initHidden().
        if key is None:
            self._hidden_key, key = jax.random.split(self._hidden_key)
        ka, kb = jax.random.split(key)
        h0a, c0a = self._init_hidden(ka)
        h0b, c0b = self._init_hidden(kb)

        pad_ids = lambda x: jnp.pad(x, ((0, s_pad - S), (0, BH - B)))
        pad_hc = lambda z: jnp.pad(z, ((0, BH - B), (0, 0)))
        ids_blocks = jnp.stack([pad_ids(x1), pad_ids(x2)], axis=0)   # (2,S_pad,BH)
        hc0_blocks = jnp.stack(
            [jnp.stack([pad_hc(h0a), pad_hc(c0a)], axis=0),
             jnp.stack([pad_hc(h0b), pad_hc(c0b)], axis=0)], axis=0)  # (2,2,BH,H)

        h_final = siamese_lstm_final_hidden(
            self.gate_table, self.w_hh_t, ids_blocks, hc0_blocks,
            seq_len=S, chunk=T)
        encoding_a = h_final[0, :B]          # == hidden_a[0].squeeze(0)
        encoding_b = h_final[1, :B]          # == hidden_b[0].squeeze(0)
        # TODO(synk): get_loss()/get_accuracy() (contrastive distance) are
        # separate methods on the torch module, not part of forward(); omitted.
        return encoding_a, encoding_b


def _reference_final_hidden(gate_table, w_hh_t, ids, h0, c0):
    """Pure-JAX reference of the recurrence (same bf16 weights, f32 math)."""
    H = h0.shape[-1]
    gt = gate_table.astype(jnp.float32)

    def step(carry, ids_t):
        h, c = carry
        gates = gt[ids_t] + jnp.dot(h.astype(w_hh_t.dtype), w_hh_t,
                                    preferred_element_type=jnp.float32)
        i = jax.nn.sigmoid(gates[:, 0 * H:1 * H])
        f = jax.nn.sigmoid(gates[:, 1 * H:2 * H])
        g = jnp.tanh(gates[:, 2 * H:3 * H])
        o = jax.nn.sigmoid(gates[:, 3 * H:4 * H])
        c = f * c + i * g
        h = o * jnp.tanh(c)
        return (h, c), None

    (h, _), _ = jax.lax.scan(step, (h0, c0), ids)
    return h


if __name__ == "__main__":
    # Small synthetic shapes consistent with the module:
    # vocab=64, embedding_dims=32, hidden_dims=32, batch=2, seq=8.
    VOCAB, E, H, B, S = 64, 32, 32, 2, 8

    root = jax.random.PRNGKey(0)
    k_model, k_x1, k_x2, k_hidden = jax.random.split(root, 4)

    model = SiameseClassifierJAX(VOCAB, E, H, B, k_model)

    x1 = jax.random.randint(k_x1, (S, B), 0, VOCAB, dtype=jnp.int32)
    x2 = jax.random.randint(k_x2, (S, B), 0, VOCAB, dtype=jnp.int32)

    enc_a, enc_b = model.forward(x1, x2, key=k_hidden)
    jax.block_until_ready((enc_a, enc_b))

    assert enc_a.shape == (B, H) and enc_b.shape == (B, H)
    assert enc_a.dtype == jnp.float32 and enc_b.dtype == jnp.float32
    assert bool(jnp.all(jnp.isfinite(enc_a))) and bool(jnp.all(jnp.isfinite(enc_b)))

    # Tolerance-asserted pure-JAX reference (same h0/c0 draw as the kernel path).
    ka, kb = jax.random.split(k_hidden)
    h0a, c0a = model._init_hidden(ka)
    h0b, c0b = model._init_hidden(kb)
    ref_a = _reference_final_hidden(model.gate_table, model.w_hh_t, x1, h0a, c0a)
    ref_b = _reference_final_hidden(model.gate_table, model.w_hh_t, x2, h0b, c0b)
    err = max(float(jnp.max(jnp.abs(enc_a - ref_a))),
              float(jnp.max(jnp.abs(enc_b - ref_b))))
    assert err < 5e-2, f"kernel/reference mismatch: max abs err = {err}"

    print("KERNEL_OK")
</pallas_src>

<mosaic_0001>
module attributes {stable_mosaic.version = 11 : i64} {
  func.func @_siamese_lstm_kernel(%arg0: i32, %arg1: i32, %arg2: memref<1x8x8xi32, #tpu.memory_space<vmem>>, %arg3: memref<64x128xbf16, #tpu.memory_space<vmem>>, %arg4: memref<32x128xbf16, #tpu.memory_space<vmem>>, %arg5: memref<1x2x8x32xf32, #tpu.memory_space<vmem>>, %arg6: memref<1x8x32xf32, #tpu.memory_space<vmem>>, %arg7: memref<8x32xf32, #tpu.memory_space<vmem>>, %arg8: memref<8x32xf32, #tpu.memory_space<vmem>>, %arg9: memref<8x8x128xf32, #tpu.memory_space<vmem>>) attributes {dimension_semantics = [#tpu.dimension_semantics<parallel>, #tpu.dimension_semantics<arbitrary>], iteration_bounds = array<i64: 2, 1>, scalar_prefetch = 0 : i64, scratch_operands = 3 : i64, tpu.core_type = #tpu.core_type<tc>, window_params = [{transform_indices = @transform_0, window_bounds = array<i64: 1, 8, 8>}, {pipeline_mode = #tpu.pipeline_mode<synchronous>, transform_indices = @transform_1, window_bounds = array<i64: 64, 128>}, {pipeline_mode = #tpu.pipeline_mode<synchronous>, transform_indices = @transform_2, window_bounds = array<i64: 32, 128>}, {transform_indices = @transform_3, window_bounds = array<i64: 1, 2, 8, 32>}, {transform_indices = @transform_4, window_bounds = array<i64: 1, 8, 32>}]} {
    %c0_i32 = arith.constant 0 : i32
    %0 = arith.cmpi eq, %arg1, %c0_i32 : i32
    %1 = arith.extui %0 : i1 to i32
    %c0_i32_0 = arith.constant 0 : i32
    %2 = arith.cmpi ne, %1, %c0_i32_0 : i32
    scf.if %2 {
      %c0_53 = arith.constant 0 : index
      %c0_54 = arith.constant 0 : index
      %c0_55 = arith.constant 0 : index
      %c0_56 = arith.constant 0 : index
      %207 = vector.load %arg5[%c0_53, %c0_54, %c0_55, %c0_56] : memref<1x2x8x32xf32, #tpu.memory_space<vmem>>, vector<1x1x8x32xf32>
      %208 = vector.shape_cast %207 : vector<1x1x8x32xf32> to vector<8x32xf32>
      %c0_57 = arith.constant 0 : index
      %c0_58 = arith.constant 0 : index
      %209 = vector.load %arg7[%c0_57, %c0_58] : memref<8x32xf32, #tpu.memory_space<vmem>>, vector<8x32xf32>
      tpu.vector_store %arg7[%c0_57, %c0_58], %208 {strides = array<i32>} : memref<8x32xf32, #tpu.memory_space<vmem>>, vector<8x32xf32>,
      %c0_59 = arith.constant 0 : index
      %c1 = arith.constant 1 : index
      %c0_60 = arith.constant 0 : index
      %c0_61 = arith.constant 0 : index
      %210 = vector.load %arg5[%c0_59, %c1, %c0_60, %c0_61] : memref<1x2x8x32xf32, #tpu.memory_space<vmem>>, vector<1x1x8x32xf32>
      %211 = vector.shape_cast %210 : vector<1x1x8x32xf32> to vector<8x32xf32>
      %c0_62 = arith.constant 0 : index
      %c0_63 = arith.constant 0 : index
      %212 = vector.load %arg8[%c0_62, %c0_63] : memref<8x32xf32, #tpu.memory_space<vmem>>, vector<8x32xf32>
      tpu.vector_store %arg8[%c0_62, %c0_63], %211 {strides = array<i32>} : memref<8x32xf32, #tpu.memory_space<vmem>>, vector<8x32xf32>,
    } else {
    }
    %c0 = arith.constant 0 : index
    %c0_1 = arith.constant 0 : index
    %c0_2 = arith.constant 0 : index
    %3 = vector.load %arg2[%c0, %c0_1, %c0_2] : memref<1x8x8xi32, #tpu.memory_space<vmem>>, vector<1x8x8xi32>
    %4 = vector.shape_cast %3 : vector<1x8x8xi32> to vector<8x8xi32>
    %5 = vector.shape_cast %4 : vector<8x8xi32> to vector<8x8x1xi32>
    %6 = tpu.iota {dimensions = array<i32: 2>} : vector<8x8x64xi32>
    %7 = vector.broadcast %5 : vector<8x8x1xi32> to vector<8x8x64xi32>
    %8 = arith.cmpi eq, %7, %6 : vector<8x8x64xi32>
    %9 = arith.extui %8 : vector<8x8x64xi1> to vector<8x8x64xi32>
    %10 = arith.sitofp %9 : vector<8x8x64xi32> to vector<8x8x64xf32>
    %11 = arith.truncf %10 : vector<8x8x64xf32> to vector<8x8x64xbf16>
    %12 = vector.shape_cast %11 : vector<8x8x64xbf16> to vector<64x64xbf16>
    %c0_3 = arith.constant 0 : index
    %c0_4 = arith.constant 0 : index
    %13 = vector.load %arg3[%c0_3, %c0_4] : memref<64x128xbf16, #tpu.memory_space<vmem>>, vector<64x128xbf16>
    %cst = arith.constant dense<0.000000e+00> : vector<64x128xf32>
    %14 = tpu.matmul %12, %13, %cst {dimension_numbers = #tpu.dot_dimension_numbers<[1], [0], [0], [1], [0, 0, 1, 1], [], []>} : vector<64x64xbf16>, vector<64x128xbf16>, vector<64x128xf32> -> vector<64x128xf32>
    %15 = vector.shape_cast %14 : vector<64x128xf32> to vector<8x8x128xf32>
    %c0_5 = arith.constant 0 : index
    %c0_6 = arith.constant 0 : index
    %c0_7 = arith.constant 0 : index
    %16 = vector.load %arg9[%c0_5, %c0_6, %c0_7] : memref<8x8x128xf32, #tpu.memory_space<vmem>>, vector<8x8x128xf32>
    tpu.vector_store %arg9[%c0_5, %c0_6, %c0_7], %15 {strides = array<i32>} : memref<8x8x128xf32, #tpu.memory_space<vmem>>, vector<8x8x128xf32>,
    %c0_8 = arith.constant 0 : index
    %c0_9 = arith.constant 0 : index
    %17 = vector.load %arg4[%c0_8, %c0_9] : memref<32x128xbf16, #tpu.memory_space<vmem>>, vector<32x128xbf16>
    %18 = tpu.iota {dimensions = array<i32: 1>} : vector<8x128xi32>
    %c64_i32 = arith.constant 64 : i32
    %19 = vector.broadcast %c64_i32 : i32 to vector<8x128xi32>
    %20 = arith.cmpi sge, %18, %19 : vector<8x128xi32>
    %c96_i32 = arith.constant 96 : i32
    %21 = vector.broadcast %c96_i32 : i32 to vector<8x128xi32>
    %22 = arith.cmpi slt, %18, %21 : vector<8x128xi32>
    %23 = arith.andi %20, %22 : vector<8x128xi1>
    %c0_10 = arith.constant 0 : index
    %c0_11 = arith.constant 0 : index
    %24 = vector.load %arg7[%c0_10, %c0_11] : memref<8x32xf32, #tpu.memory_space<vmem>>, vector<8x32xf32>
    %c0_12 = arith.constant 0 : index
    %c0_13 = arith.constant 0 : index
    %25 = vector.load %arg8[%c0_12, %c0_13] : memref<8x32xf32, #tpu.memory_space<vmem>>, vector<8x32xf32>
    %c0_i32_14 = arith.constant 0 : i32
    %26 = arith.index_cast %c0_i32_14 : i32 to index
    %c0_15 = arith.constant 0 : index
    %c0_16 = arith.constant 0 : index
    %27 = vector.load %arg9[%26, %c0_15, %c0_16] : memref<8x8x128xf32, #tpu.memory_space<vmem>>, vector<1x8x128xf32>
    %28 = vector.shape_cast %27 : vector<1x8x128xf32> to vector<8x128xf32>
    %29 = arith.truncf %24 : vector<8x32xf32> to vector<8x32xbf16>
    %cst_17 = arith.constant dense<0.000000e+00> : vector<8x128xf32>
    %30 = tpu.matmul %29, %17, %cst_17 {dimension_numbers = #tpu.dot_dimension_numbers<[1], [0], [0], [1], [0, 0, 1, 1], [], []>} : vector<8x32xbf16>, vector<32x128xbf16>, vector<8x128xf32> -> vector<8x128xf32>
    %31 = arith.addf %28, %30 : vector<8x128xf32>
    %32 = math.tanh %31 : vector<8x128xf32>
    %33 = arith.negf %31 : vector<8x128xf32>
    %34 = math.exp %33 : vector<8x128xf32>
    %cst_18 = arith.constant 1.000000e+00 : f32
    %35 = vector.broadcast %cst_18 : f32 to vector<8x128xf32>
    %36 = arith.addf %35, %34 : vector<8x128xf32>
    %37 = arith.divf %35, %36 : vector<8x128xf32>
    %38 = arith.select %23, %32, %37 : vector<8x128xi1>, vector<8x128xf32>
    %39 = vector.extract_strided_slice %38 {offsets = [0, 0], sizes = [8, 32], strides = [1, 1]} : vector<8x128xf32> to vector<8x32xf32>
    %40 = vector.extract_strided_slice %38 {offsets = [0, 32], sizes = [8, 32], strides = [1, 1]} : vector<8x128xf32> to vector<8x32xf32>
    %41 = vector.extract_strided_slice %38 {offsets = [0, 64], sizes = [8, 32], strides = [1, 1]} : vector<8x128xf32> to vector<8x32xf32>
    %42 = vector.extract_strided_slice %38 {offsets = [0, 96], sizes = [8, 32], strides = [1, 1]} : vector<8x128xf32> to vector<8x32xf32>
    %43 = arith.mulf %40, %25 : vector<8x32xf32>
    %44 = arith.mulf %39, %41 : vector<8x32xf32>
    %45 = arith.addf %43, %44 : vector<8x32xf32>
    %46 = math.tanh %45 : vector<8x32xf32>
    %47 = arith.mulf %42, %46 : vector<8x32xf32>
    %c1_i32 = arith.constant 1 : i32
    %48 = arith.index_cast %c1_i32 : i32 to index
    %c0_19 = arith.constant 0 : index
    %c0_20 = arith.constant 0 : index
    %49 = vector.load %arg9[%48, %c0_19, %c0_20] : memref<8x8x128xf32, #tpu.memory_space<vmem>>, vector<1x8x128xf32>
    %50 = vector.shape_cast %49 : vector<1x8x128xf32> to vector<8x128xf32>
    %51 = arith.truncf %47 : vector<8x32xf32> to vector<8x32xbf16>
    %cst_21 = arith.constant dense<0.000000e+00> : vector<8x128xf32>
    %52 = tpu.matmul %51, %17, %cst_21 {dimension_numbers = #tpu.dot_dimension_numbers<[1], [0], [0], [1], [0, 0, 1, 1], [], []>} : vector<8x32xbf16>, vector<32x128xbf16>, vector<8x128xf32> -> vector<8x128xf32>
    %53 = arith.addf %50, %52 : vector<8x128xf32>
    %54 = math.tanh %53 : vector<8x128xf32>
    %55 = arith.negf %53 : vector<8x128xf32>
    %56 = math.exp %55 : vector<8x128xf32>
    %cst_22 = arith.constant 1.000000e+00 : f32
    %57 = vector.broadcast %cst_22 : f32 to vector<8x128xf32>
    %58 = arith.addf %57, %56 : vector<8x128xf32>
    %59 = arith.divf %57, %58 : vector<8x128xf32>
    %60 = arith.select %23, %54, %59 : vector<8x128xi1>, vector<8x128xf32>
    %61 = vector.extract_strided_slice %60 {offsets = [0, 0], sizes = [8, 32], strides = [1, 1]} : vector<8x128xf32> to vector<8x32xf32>
    %62 = vector.extract_strided_slice %60 {offsets = [0, 32], sizes = [8, 32], strides = [1, 1]} : vector<8x128xf32> to vector<8x32xf32>
    %63 = vector.extract_strided_slice %60 {offsets = [0, 64], sizes = [8, 32], strides = [1, 1]} : vector<8x128xf32> to vector<8x32xf32>
    %64 = vector.extract_strided_slice %60 {offsets = [0, 96], sizes = [8, 32], strides = [1, 1]} : vector<8x128xf32> to vector<8x32xf32>
    %65 = arith.mulf %62, %45 : vector<8x32xf32>
    %66 = arith.mulf %61, %63 : vector<8x32xf32>
    %67 = arith.addf %65, %66 : vector<8x32xf32>
    %68 = math.tanh %67 : vector<8x32xf32>
    %69 = arith.mulf %64, %68 : vector<8x32xf32>
    %c2_i32 = arith.constant 2 : i32
    %70 = arith.index_cast %c2_i32 : i32 to index
    %c0_23 = arith.constant 0 : index
    %c0_24 = arith.constant 0 : index
    %71 = vector.load %arg9[%70, %c0_23, %c0_24] : memref<8x8x128xf32, #tpu.memory_space<vmem>>, vector<1x8x128xf32>
    %72 = vector.shape_cast %71 : vector<1x8x128xf32> to vector<8x128xf32>
    %73 = arith.truncf %69 : vector<8x32xf32> to vector<8x32xbf16>
    %cst_25 = arith.constant dense<0.000000e+00> : vector<8x128xf32>
    %74 = tpu.matmul %73, %17, %cst_25 {dimension_numbers = #tpu.dot_dimension_numbers<[1], [0], [0], [1], [0, 0, 1, 1], [], []>} : vector<8x32xbf16>, vector<32x128xbf16>, vector<8x128xf32> -> vector<8x128xf32>
    %75 = arith.addf %72, %74 : vector<8x128xf32>
    %76 = math.tanh %75 : vector<8x128xf32>
    %77 = arith.negf %75 : vector<8x128xf32>
    %78 = math.exp %77 : vector<8x128xf32>
    %cst_26 = arith.constant 1.000000e+00 : f32
    %79 = vector.broadcast %cst_26 : f32 to vector<8x128xf32>
    %80 = arith.addf %79, %78 : vector<8x128xf32>
    %81 = arith.divf %79, %80 : vector<8x128xf32>
    %82 = arith.select %23, %76, %81 : vector<8x128xi1>, vector<8x128xf32>
    %83 = vector.extract_strided_slice %82 {offsets = [0, 0], sizes = [8, 32], strides = [1, 1]} : vector<8x128xf32> to vector<8x32xf32>
    %84 = vector.extract_strided_slice %82 {offsets = [0, 32], sizes = [8, 32], strides = [1, 1]} : vector<8x128xf32> to vector<8x32xf32>
    %85 = vector.extract_strided_slice %82 {offsets = [0, 64], sizes = [8, 32], strides = [1, 1]} : vector<8x128xf32> to vector<8x32xf32>
    %86 = vector.extract_strided_slice %82 {offsets = [0, 96], sizes = [8, 32], strides = [1, 1]} : vector<8x128xf32> to vector<8x32xf32>
    %87 = arith.mulf %84, %67 : vector<8x32xf32>
    %88 = arith.mulf %83, %85 : vector<8x32xf32>
    %89 = arith.addf %87, %88 : vector<8x32xf32>
    %90 = math.tanh %89 : vector<8x32xf32>
    %91 = arith.mulf %86, %90 : vector<8x32xf32>
    %c3_i32 = arith.constant 3 : i32
    %92 = arith.index_cast %c3_i32 : i32 to index
    %c0_27 = arith.constant 0 : index
    %c0_28 = arith.constant 0 : index
    %93 = vector.load %arg9[%92, %c0_27, %c0_28] : memref<8x8x128xf32, #tpu.memory_space<vmem>>, vector<1x8x128xf32>
    %94 = vector.shape_cast %93 : vector<1x8x128xf32> to vector<8x128xf32>
    %95 = arith.truncf %91 : vector<8x32xf32> to vector<8x32xbf16>
    %cst_29 = arith.constant dense<0.000000e+00> : vector<8x128xf32>
    %96 = tpu.matmul %95, %17, %cst_29 {dimension_numbers = #tpu.dot_dimension_numbers<[1], [0], [0], [1], [0, 0, 1, 1], [], []>} : vector<8x32xbf16>, vector<32x128xbf16>, vector<8x128xf32> -> vector<8x128xf32>
    %97 = arith.addf %94, %96 : vector<8x128xf32>
    %98 = math.tanh %97 : vector<8x128xf32>
    %99 = arith.negf %97 : vector<8x128xf32>
    %100 = math.exp %99 : vector<8x128xf32>
    %cst_30 = arith.constant 1.000000e+00 : f32
    %101 = vector.broadcast %cst_30 : f32 to vector<8x128xf32>
    %102 = arith.addf %101, %100 : vector<8x128xf32>
    %103 = arith.divf %101, %102 : vector<8x128xf32>
    %104 = arith.select %23, %98, %103 : vector<8x128xi1>, vector<8x128xf32>
    %105 = vector.extract_strided_slice %104 {offsets = [0, 0], sizes = [8, 32], strides = [1, 1]} : vector<8x128xf32> to vector<8x32xf32>
    %106 = vector.extract_strided_slice %104 {offsets = [0, 32], sizes = [8, 32], strides = [1, 1]} : vector<8x128xf32> to vector<8x32xf32>
    %107 = vector.extract_strided_slice %104 {offsets = [0, 64], sizes = [8, 32], strides = [1, 1]} : vector<8x128xf32> to vector<8x32xf32>
    %108 = vector.extract_strided_slice %104 {offsets = [0, 96], sizes = [8, 32], strides = [1, 1]} : vector<8x128xf32> to vector<8x32xf32>
    %109 = arith.mulf %106, %89 : vector<8x32xf32>
    %110 = arith.mulf %105, %107 : vector<8x32xf32>
    %111 = arith.addf %109, %110 : vector<8x32xf32>
    %112 = math.tanh %111 : vector<8x32xf32>
    %113 = arith.mulf %108, %112 : vector<8x32xf32>
    %c4_i32 = arith.constant 4 : i32
    %114 = arith.index_cast %c4_i32 : i32 to index
    %c0_31 = arith.constant 0 : index
    %c0_32 = arith.constant 0 : index
    %115 = vector.load %arg9[%114, %c0_31, %c0_32] : memref<8x8x128xf32, #tpu.memory_space<vmem>>, vector<1x8x128xf32>
    %116 = vector.shape_cast %115 : vector<1x8x128xf32> to vector<8x128xf32>
    %117 = arith.truncf %113 : vector<8x32xf32> to vector<8x32xbf16>
    %cst_33 = arith.constant dense<0.000000e+00> : vector<8x128xf32>
    %118 = tpu.matmul %117, %17, %cst_33 {dimension_numbers = #tpu.dot_dimension_numbers<[1], [0], [0], [1], [0, 0, 1, 1], [], []>} : vector<8x32xbf16>, vector<32x128xbf16>, vector<8x128xf32> -> vector<8x128xf32>
    %119 = arith.addf %116, %118 : vector<8x128xf32>
    %120 = math.tanh %119 : vector<8x128xf32>
    %121 = arith.negf %119 : vector<8x128xf32>
    %122 = math.exp %121 : vector<8x128xf32>
    %cst_34 = arith.constant 1.000000e+00 : f32
    %123 = vector.broadcast %cst_34 : f32 to vector<8x128xf32>
    %124 = arith.addf %123, %122 : vector<8x128xf32>
    %125 = arith.divf %123, %124 : vector<8x128xf32>
    %126 = arith.select %23, %120, %125 : vector<8x128xi1>, vector<8x128xf32>
    %127 = vector.extract_strided_slice %126 {offsets = [0, 0], sizes = [8, 32], strides = [1, 1]} : vector<8x128xf32> to vector<8x32xf32>
    %128 = vector.extract_strided_slice %126 {offsets = [0, 32], sizes = [8, 32], strides = [1, 1]} : vector<8x128xf32> to vector<8x32xf32>
    %129 = vector.extract_strided_slice %126 {offsets = [0, 64], sizes = [8, 32], strides = [1, 1]} : vector<8x128xf32> to vector<8x32xf32>
    %130 = vector.extract_strided_slice %126 {offsets = [0, 96], sizes = [8, 32], strides = [1, 1]} : vector<8x128xf32> to vector<8x32xf32>
    %131 = arith.mulf %128, %111 : vector<8x32xf32>
    %132 = arith.mulf %127, %129 : vector<8x32xf32>
    %133 = arith.addf %131, %132 : vector<8x32xf32>
    %134 = math.tanh %133 : vector<8x32xf32>
    %135 = arith.mulf %130, %134 : vector<8x32xf32>
    %c5_i32 = arith.constant 5 : i32
    %136 = arith.index_cast %c5_i32 : i32 to index
    %c0_35 = arith.constant 0 : index
    %c0_36 = arith.constant 0 : index
    %137 = vector.load %arg9[%136, %c0_35, %c0_36] : memref<8x8x128xf32, #tpu.memory_space<vmem>>, vector<1x8x128xf32>
    %138 = vector.shape_cast %137 : vector<1x8x128xf32> to vector<8x128xf32>
    %139 = arith.truncf %135 : vector<8x32xf32> to vector<8x32xbf16>
    %cst_37 = arith.constant dense<0.000000e+00> : vector<8x128xf32>
    %140 = tpu.matmul %139, %17, %cst_37 {dimension_numbers = #tpu.dot_dimension_numbers<[1], [0], [0], [1], [0, 0, 1, 1], [], []>} : vector<8x32xbf16>, vector<32x128xbf16>, vector<8x128xf32> -> vector<8x128xf32>
    %141 = arith.addf %138, %140 : vector<8x128xf32>
    %142 = math.tanh %141 : vector<8x128xf32>
    %143 = arith.negf %141 : vector<8x128xf32>
    %144 = math.exp %143 : vector<8x128xf32>
    %cst_38 = arith.constant 1.000000e+00 : f32
    %145 = vector.broadcast %cst_38 : f32 to vector<8x128xf32>
    %146 = arith.addf %145, %144 : vector<8x128xf32>
    %147 = arith.divf %145, %146 : vector<8x128xf32>
    %148 = arith.select %23, %142, %147 : vector<8x128xi1>, vector<8x128xf32>
    %149 = vector.extract_strided_slice %148 {offsets = [0, 0], sizes = [8, 32], strides = [1, 1]} : vector<8x128xf32> to vector<8x32xf32>
    %150 = vector.extract_strided_slice %148 {offsets = [0, 32], sizes = [8, 32], strides = [1, 1]} : vector<8x128xf32> to vector<8x32xf32>
    %151 = vector.extract_strided_slice %148 {offsets = [0, 64], sizes = [8, 32], strides = [1, 1]} : vector<8x128xf32> to vector<8x32xf32>
    %152 = vector.extract_strided_slice %148 {offsets = [0, 96], sizes = [8, 32], strides = [1, 1]} : vector<8x128xf32> to vector<8x32xf32>
    %153 = arith.mulf %150, %133 : vector<8x32xf32>
    %154 = arith.mulf %149, %151 : vector<8x32xf32>
    %155 = arith.addf %153, %154 : vector<8x32xf32>
    %156 = math.tanh %155 : vector<8x32xf32>
    %157 = arith.mulf %152, %156 : vector<8x32xf32>
    %c6_i32 = arith.constant 6 : i32
    %158 = arith.index_cast %c6_i32 : i32 to index
    %c0_39 = arith.constant 0 : index
    %c0_40 = arith.constant 0 : index
    %159 = vector.load %arg9[%158, %c0_39, %c0_40] : memref<8x8x128xf32, #tpu.memory_space<vmem>>, vector<1x8x128xf32>
    %160 = vector.shape_cast %159 : vector<1x8x128xf32> to vector<8x128xf32>
    %161 = arith.truncf %157 : vector<8x32xf32> to vector<8x32xbf16>
    %cst_41 = arith.constant dense<0.000000e+00> : vector<8x128xf32>
    %162 = tpu.matmul %161, %17, %cst_41 {dimension_numbers = #tpu.dot_dimension_numbers<[1], [0], [0], [1], [0, 0, 1, 1], [], []>} : vector<8x32xbf16>, vector<32x128xbf16>, vector<8x128xf32> -> vector<8x128xf32>
    %163 = arith.addf %160, %162 : vector<8x128xf32>
    %164 = math.tanh %163 : vector<8x128xf32>
    %165 = arith.negf %163 : vector<8x128xf32>
    %166 = math.exp %165 : vector<8x128xf32>
    %cst_42 = arith.constant 1.000000e+00 : f32
    %167 = vector.broadcast %cst_42 : f32 to vector<8x128xf32>
    %168 = arith.addf %167, %166 : vector<8x128xf32>
    %169 = arith.divf %167, %168 : vector<8x128xf32>
    %170 = arith.select %23, %164, %169 : vector<8x128xi1>, vector<8x128xf32>
    %171 = vector.extract_strided_slice %170 {offsets = [0, 0], sizes = [8, 32], strides = [1, 1]} : vector<8x128xf32> to vector<8x32xf32>
    %172 = vector.extract_strided_slice %170 {offsets = [0, 32], sizes = [8, 32], strides = [1, 1]} : vector<8x128xf32> to vector<8x32xf32>
    %173 = vector.extract_strided_slice %170 {offsets = [0, 64], sizes = [8, 32], strides = [1, 1]} : vector<8x128xf32> to vector<8x32xf32>
    %174 = vector.extract_strided_slice %170 {offsets = [0, 96], sizes = [8, 32], strides = [1, 1]} : vector<8x128xf32> to vector<8x32xf32>
    %175 = arith.mulf %172, %155 : vector<8x32xf32>
    %176 = arith.mulf %171, %173 : vector<8x32xf32>
    %177 = arith.addf %175, %176 : vector<8x32xf32>
    %178 = math.tanh %177 : vector<8x32xf32>
    %179 = arith.mulf %174, %178 : vector<8x32xf32>
    %c7_i32 = arith.constant 7 : i32
    %180 = arith.index_cast %c7_i32 : i32 to index
    %c0_43 = arith.constant 0 : index
    %c0_44 = arith.constant 0 : index
    %181 = vector.load %arg9[%180, %c0_43, %c0_44] : memref<8x8x128xf32, #tpu.memory_space<vmem>>, vector<1x8x128xf32>
    %182 = vector.shape_cast %181 : vector<1x8x128xf32> to vector<8x128xf32>
    %183 = arith.truncf %179 : vector<8x32xf32> to vector<8x32xbf16>
    %cst_45 = arith.constant dense<0.000000e+00> : vector<8x128xf32>
    %184 = tpu.matmul %183, %17, %cst_45 {dimension_numbers = #tpu.dot_dimension_numbers<[1], [0], [0], [1], [0, 0, 1, 1], [], []>} : vector<8x32xbf16>, vector<32x128xbf16>, vector<8x128xf32> -> vector<8x128xf32>
    %185 = arith.addf %182, %184 : vector<8x128xf32>
    %186 = math.tanh %185 : vector<8x128xf32>
    %187 = arith.negf %185 : vector<8x128xf32>
    %188 = math.exp %187 : vector<8x128xf32>
    %cst_46 = arith.constant 1.000000e+00 : f32
    %189 = vector.broadcast %cst_46 : f32 to vector<8x128xf32>
    %190 = arith.addf %189, %188 : vector<8x128xf32>
    %191 = arith.divf %189, %190 : vector<8x128xf32>
    %192 = arith.select %23, %186, %191 : vector<8x128xi1>, vector<8x128xf32>
    %193 = vector.extract_strided_slice %192 {offsets = [0, 0], sizes = [8, 32], strides = [1, 1]} : vector<8x128xf32> to vector<8x32xf32>
    %194 = vector.extract_strided_slice %192 {offsets = [0, 32], sizes = [8, 32], strides = [1, 1]} : vector<8x128xf32> to vector<8x32xf32>
    %195 = vector.extract_strided_slice %192 {offsets = [0, 64], sizes = [8, 32], strides = [1, 1]} : vector<8x128xf32> to vector<8x32xf32>
    %196 = vector.extract_strided_slice %192 {offsets = [0, 96], sizes = [8, 32], strides = [1, 1]} : vector<8x128xf32> to vector<8x32xf32>
    %197 = arith.mulf %194, %177 : vector<8x32xf32>
    %198 = arith.mulf %193, %195 : vector<8x32xf32>
    %199 = arith.addf %197, %198 : vector<8x32xf32>
    %200 = math.tanh %199 : vector<8x32xf32>
    %201 = arith.mulf %196, %200 : vector<8x32xf32>
    %c8_i32 = arith.constant 8 : i32
    %c0_47 = arith.constant 0 : index
    %c0_48 = arith.constant 0 : index
    %202 = vector.load %arg7[%c0_47, %c0_48] : memref<8x32xf32, #tpu.memory_space<vmem>>, vector<8x32xf32>
    tpu.vector_store %arg7[%c0_47, %c0_48], %201 {strides = array<i32>} : memref<8x32xf32, #tpu.memory_space<vmem>>, vector<8x32xf32>,
    %c0_49 = arith.constant 0 : index
    %c0_50 = arith.constant 0 : index
    %203 = vector.load %arg8[%c0_49, %c0_50] : memref<8x32xf32, #tpu.memory_space<vmem>>, vector<8x32xf32>
    tpu.vector_store %arg8[%c0_49, %c0_50], %199 {strides = array<i32>} : memref<8x32xf32, #tpu.memory_space<vmem>>, vector<8x32xf32>,
    %c0_i32_51 = arith.constant 0 : i32
    %204 = arith.cmpi eq, %arg1, %c0_i32_51 : i32
    %205 = arith.extui %204 : i1 to i32
    %c0_i32_52 = arith.constant 0 : i32
    %206 = arith.cmpi ne, %205, %c0_i32_52 : i32
    scf.if %206 {
      %c0_53 = arith.constant 0 : index
      %c0_54 = arith.constant 0 : index
      %c0_55 = arith.constant 0 : index
      %207 = vector.load %arg6[%c0_53, %c0_54, %c0_55] : memref<1x8x32xf32, #tpu.memory_space<vmem>>, vector<1x8x32xf32>
      %208 = vector.shape_cast %207 : vector<1x8x32xf32> to vector<8x32xf32>
      %209 = vector.shape_cast %201 : vector<8x32xf32> to vector<1x8x32xf32>
      tpu.vector_store %arg6[%c0_53, %c0_54, %c0_55], %209 {strides = array<i32>} : memref<1x8x32xf32, #tpu.memory_space<vmem>>, vector<1x8x32xf32>,
    } else {
    }
    return
  }
  func.func @transform_0(%arg0: i32, %arg1: i32) -> (i32, i32, i32) {
    %c0_i32 = arith.constant 0 : i32
    %c0_i32_0 = arith.constant 0 : i32
    return %arg0, %arg1, %c0_i32 : i32, i32, i32
  }
  func.func @transform_1(%arg0: i32, %arg1: i32) -> (i32, i32) {
    %c0_i32 = arith.constant 0 : i32
    %c0_i32_0 = arith.constant 0 : i32
    %c0_i32_1 = arith.constant 0 : i32
    return %c0_i32, %c0_i32_0 : i32, i32
  }
  func.func @transform_2(%arg0: i32, %arg1: i32) -> (i32, i32) {
    %c0_i32 = arith.constant 0 : i32
    %c0_i32_0 = arith.constant 0 : i32
    %c0_i32_1 = arith.constant 0 : i32
    return %c0_i32, %c0_i32_0 : i32, i32
  }
  func.func @transform_3(%arg0: i32, %arg1: i32) -> (i32, i32, i32, i32) {
    %c0_i32 = arith.constant 0 : i32
    %c0_i32_0 = arith.constant 0 : i32
    %c0_i32_1 = arith.constant 0 : i32
    %c0_i32_2 = arith.constant 0 : i32
    return %arg0, %c0_i32, %c0_i32_0, %c0_i32_1 : i32, i32, i32, i32
  }
  func.func @transform_4(%arg0: i32, %arg1: i32) -> (i32, i32, i32) {
    %c0_i32 = arith.constant 0 : i32
    %c0_i32_0 = arith.constant 0 : i32
    %c0_i32_1 = arith.constant 0 : i32
    return %arg0, %c0_i32, %c0_i32_0 : i32, i32, i32
  }
}

</mosaic_0001>

<llo_original>
// kernel: siamese_lstm_final_hidden.1
$region0: #{siamese_lstm_final_hidden.1}
  #allocation0 [shape = 'u32[]', space=smem, size = 0x4, offset = 0x4, fixed_abs, tag = 'smem constant byte address 0x4 - core index']
  #allocation1 [shape = 'u32[144,128]{1,0:T(1,128)}', space=vmem, size = 0x12000, scoped, tag = 'internal scratch']
  #allocation2 [shape = 'f32[8,32]{1,0:T(8,128)}', space=vmem, size = 0x1000, scoped, tag = 'scratch operand']
  #allocation3 [shape = 'f32[8,32]{1,0:T(8,128)}', space=vmem, size = 0x1000, scoped, tag = 'scratch operand']
  #allocation4 [shape = 'f32[8,8,128]{2,1,0:T(8,128)}', space=vmem, size = 0x8000, scoped, tag = 'scratch operand']
  %s0 = inlined_call_operand.hbm [shape: s32[2,8,8], index: 0, kind: input, shape index: {}]
  %s1 = inlined_call_operand.hbm [shape: bf16[64,128], index: 1, kind: input, shape index: {}]
  %s2 = inlined_call_operand.hbm [shape: bf16[32,128], index: 2, kind: input, shape index: {}]
  %s3 = inlined_call_operand.hbm [shape: f32[2,2,8,32], index: 3, kind: input, shape index: {}]
  %s4 = inlined_call_operand.hbm [shape: f32[2,8,32], index: 4, kind: output, shape index: {}]
  %s5 = sld [smem:[#allocation0]]
  $region73: #{siamese_lstm_final_hidden.1} parent=0
    _
  %s7 = ssub.s32 1, %s5
  %s8 = scalar_select 0, %s7, %s5
  $region1: #{siamese_lstm_final_hidden.1} parent=0
    #allocation5 [shape = 'u8[8192]{0}', space=vmem, size = 0x2000, scoped, tag = 'input window, operand 0']
    #allocation6 [shape = 's32[2]{0}', space=sflag, size = 0x8, scoped, tag = 'scoped memory for siamese_lstm_final_hidden.1']
    #allocation7 [shape = 's32[2]{0}', space=sflag, size = 0x8, scoped, tag = 'scoped memory for siamese_lstm_final_hidden.1']
    #allocation8 [shape = 'u8[16384]{0}', space=vmem, size = 0x4000, scoped, tag = 'input window, operand 1, single buffered']
    #allocation9 [shape = 's32[1]{0}', space=sflag, size = 0x4, scoped, tag = 'scoped memory for siamese_lstm_final_hidden.1']
    #allocation10 [shape = 'u8[8192]{0}', space=vmem, size = 0x2000, scoped, tag = 'input window, operand 2, single buffered']
    #allocation11 [shape = 'u8[16384]{0}', space=vmem, size = 0x4000, scoped, tag = 'input window, operand 3']
    #allocation12 [shape = 's32[2]{0}', space=sflag, size = 0x8, scoped, tag = 'scoped memory for siamese_lstm_final_hidden.1']
    #allocation13 [shape = 'u8[8192]{0}', space=vmem, size = 0x2000, scoped, tag = 'output window, operand 0']
    %9 = vsyncpa [#allocation6], 0
    %s10 = scalar_lea.sflag [#allocation6], 1
    %11 = vsyncpa %s10, 0
    %12 = vsyncpa [#allocation9], 0
    %13 = vsyncpa [#allocation12], 0
    %s14 = scalar_lea.sflag [#allocation12], 1
    %15 = vsyncpa %s14, 0
    %16 = vsyncpa [#allocation7], 0
    %s17 = scalar_lea.sflag [#allocation7], 1
    %18 = vsyncpa %s17, 0
    loop: start=0, step=1, limit=4
    $region2: #{siamese_lstm_final_hidden.1} parent=1 // loop_pre_header
      _
    $region3: #{siamese_lstm_final_hidden.1} parent=1 // loop_header
      %s20 = sphi 0, %s24
      %p21 = scmp.ge.s32.totalorder %s20, 4
      %s27 = sphi 0, %s39
      %s28 = sphi 0, %s35
      %s29 = sphi 0, %s27
      %s30 = sphi 0, %s28
      %s31 = sphi 0, %s29
      %s32 = sphi 0, %s30
      %s44 = sphi 0, %s46
      %s47 = sphi 0, %s44
      %s48 = sphi 0, %s47
      %s64 = sphi 0, %s48
      %s68 = sphi 0, %s68
      %s70 = sphi 0, %s68
      %s71 = sphi 0, %s70
      %s85 = sphi 0, %s71
      %s89 = sphi 0, %s89
      %s91 = sphi 0, %s89
      %s92 = sphi 0, %s91
      %s106 = sphi 0, %s92
      %s112 = sphi 0, %s114
      %s115 = sphi 0, %s112
      %s116 = sphi 0, %s115
      %s132 = sphi 0, %s116
      %s138 = sphi 0, %s140
      %s141 = sphi 0, %s138
      %s142 = sphi 0, %s141
      %s158 = sphi 0, %s142
    $region4: #{siamese_lstm_final_hidden.1} parent=1 // loop_header_branch
      %23 = sbr.rel (%p21) target = $region8
    $region5: #{siamese_lstm_final_hidden.1} parent=1 // loop_body
      %s25 = ssub.s32 %s20, 1
      %s26 = ssub.s32 %s20, 2
      %s33 = sadd.s32 1, %s28
      %p34 = scmp.ge.s32.totalorder %s33, 1
      %s35 = scalar_select %p34, 0, %s33
      %s36 = sadd.s32 1, %s27
      %s37 = scalar_select %p34, %s36, %s27
      %p38 = scmp.ge.s32.totalorder %s37, 2
      %s39 = scalar_select %p38, 0, %s37
      %s40 = ssub.s32 %s27, %s39
      %s41 = ssub.s32 %s28, %s35
      %s42 = sor.u32 %s40, %s41
      %p43 = scmp.eq.s32.totalorder %s42, 0
      %s45 = sadd.s32 %s44, 1
      %s46 = scalar_select %p43, %s44, %s45
      %p49 = pneg %p43
      %p50 = scmp.eq.s32.totalorder %s20, 1
      %p51 = por %p49, %p50
      %p52 = scmp.ne.s32.totalorder %s44, %s47
      %p53 = scmp.eq.s32.totalorder %s20, 0
      %p54 = por %p52, %p53
      %p55 = scmp.ne.s32.totalorder %s44, %s47
      %p56 = scmp.eq.s32.totalorder %s25, 1
      %p57 = por %p55, %p56
      %p58 = scmp.ne.s32.totalorder %s47, %s48
      %p59 = scmp.eq.s32.totalorder %s25, 0
      %p60 = por %p58, %p59
      %p61 = scmp.ne.s32.totalorder %s47, %s48
      %p62 = scmp.eq.s32.totalorder %s26, 1
      %p63 = por %p61, %p62
      %p65 = scmp.ne.s32.totalorder %s48, %s64
      %p66 = scmp.eq.s32.totalorder %s26, 0
      %p67 = por %p65, %p66
      %s69 = sadd.s32 %s68, 1
      %p72 = scmp.eq.s32.totalorder %s20, 1
      %p73 = scmp.ne.s32.totalorder %s68, %s70
      %p74 = scmp.eq.s32.totalorder %s20, 0
      %p75 = por %p73, %p74
      %p76 = scmp.ne.s32.totalorder %s68, %s70
      %p77 = scmp.eq.s32.totalorder %s25, 1
      %p78 = por %p76, %p77
      %p79 = scmp.ne.s32.totalorder %s70, %s71
      %p80 = scmp.eq.s32.totalorder %s25, 0
      %p81 = por %p79, %p80
      %p82 = scmp.ne.s32.totalorder %s70, %s71
      %p83 = scmp.eq.s32.totalorder %s26, 1
      %p84 = por %p82, %p83
      %p86 = scmp.ne.s32.totalorder %s71, %s85
      %p87 = scmp.eq.s32.totalorder %s26, 0
      %p88 = por %p86, %p87
      %s90 = sadd.s32 %s89, 1
      %p93 = scmp.eq.s32.totalorder %s20, 1
      %p94 = scmp.ne.s32.totalorder %s89, %s91
      %p95 = scmp.eq.s32.totalorder %s20, 0
      %p96 = por %p94, %p95
      %p97 = scmp.ne.s32.totalorder %s89, %s91
      %p98 = scmp.eq.s32.totalorder %s25, 1
      %p99 = por %p97, %p98
      %p100 = scmp.ne.s32.totalorder %s91, %s92
      %p101 = scmp.eq.s32.totalorder %s25, 0
      %p102 = por %p100, %p101
      %p103 = scmp.ne.s32.totalorder %s91, %s92
      %p104 = scmp.eq.s32.totalorder %s26, 1
      %p105 = por %p103, %p104
      %p107 = scmp.ne.s32.totalorder %s92, %s106
      %p108 = scmp.eq.s32.totalorder %s26, 0
      %p109 = por %p107, %p108
      %s110 = ssub.s32 %s27, %s39
      %p111 = scmp.eq.s32.totalorder %s110, 0
      %s113 = sadd.s32 %s112, 1
      %s114 = scalar_select %p111, %s112, %s113
      %p117 = pneg %p111
      %p118 = scmp.eq.s32.totalorder %s20, 1
      %p119 = por %p117, %p118
      %p120 = scmp.ne.s32.totalorder %s112, %s115
      %p121 = scmp.eq.s32.totalorder %s20, 0
      %p122 = por %p120, %p121
      %p123 = scmp.ne.s32.totalorder %s112, %s115
      %p124 = scmp.eq.s32.totalorder %s25, 1
      %p125 = por %p123, %p124
      %p126 = scmp.ne.s32.totalorder %s115, %s116
      %p127 = scmp.eq.s32.totalorder %s25, 0
      %p128 = por %p126, %p127
      %p129 = scmp.ne.s32.totalorder %s115, %s116
      %p130 = scmp.eq.s32.totalorder %s26, 1
      %p131 = por %p129, %p130
      %p133 = scmp.ne.s32.totalorder %s116, %s132
      %p134 = scmp.eq.s32.totalorder %s26, 0
      %p135 = por %p133, %p134
      %s136 = ssub.s32 %s27, %s39
      %p137 = scmp.eq.s32.totalorder %s136, 0
      %s139 = sadd.s32 %s138, 1
      %s140 = scalar_select %p137, %s138, %s139
      %p143 = pneg %p137
      %p144 = scmp.eq.s32.totalorder %s20, 1
      %p145 = por %p143, %p144
      %p146 = scmp.ne.s32.totalorder %s138, %s141
      %p147 = scmp.eq.s32.totalorder %s20, 0
      %p148 = por %p146, %p147
      %p149 = scmp.ne.s32.totalorder %s138, %s141
      %p150 = scmp.eq.s32.totalorder %s25, 1
      %p151 = por %p149, %p150
      %p152 = scmp.ne.s32.totalorder %s141, %s142
      %p153 = scmp.eq.s32.totalorder %s25, 0
      %p154 = por %p152, %p153
      %p155 = scmp.ne.s32.totalorder %s141, %s142
      %p156 = scmp.eq.s32.totalorder %s26, 1
      %p157 = por %p155, %p156
      %p159 = scmp.ne.s32.totalorder %s142, %s158
      %p160 = scmp.eq.s32.totalorder %s26, 0
      %p161 = por %p159, %p160
      %p162 = scmp.le.s32.totalorder 1, %s20
      %p163 = scmp.lt.s32.totalorder %s20, 3
      %p164 = pnand %p162, %p163
      %p165 = pneg %p164
      // Predicated region
      $region9: #{siamese_lstm_final_hidden.1} parent=5 // pred_check
        _
      $region10: #{siamese_lstm_final_hidden.1} parent=5 // pred_check_branch
        %167 = sbr.rel (%p164) target = $region12
      $region11: #{siamese_lstm_final_hidden.1} parent=5 // pred_region
        %s168 = ssub.s32 %s20, 1
        // Predicated region
        $region13: #{siamese_lstm_final_hidden.1} parent=11 // pred_check
          %p169 = pneg %p81
        $region14: #{siamese_lstm_final_hidden.1} parent=11 // pred_check_branch
          %171 = sbr.rel (%p169) target = $region16
        $region15: #{siamese_lstm_final_hidden.1} parent=11 // pred_region
          %s173 = ssub.s32 512, 512
          %174 = vsyncadd [#allocation9], %s173
          %s175 = sshll.u32 [#allocation8], 4
          %s176 = int_to_ptr.vmem [resolvable:$true] %s175
          %181 = dma.hbm_to_vmem [thread:$0]  %s1, 512, %s176, [#allocation9], 64, 64, 4
        $region16: #{siamese_lstm_final_hidden.1} parent=11 // pred_fallthru
          _
        // Predicated region
        $region17: #{siamese_lstm_final_hidden.1} parent=11 // pred_check
          %p182 = pneg %p102
        $region18: #{siamese_lstm_final_hidden.1} parent=11 // pred_check_branch
          %184 = sbr.rel (%p182) target = $region20
        $region19: #{siamese_lstm_final_hidden.1} parent=11 // pred_region
          %s186 = ssub.s32 256, 256
          %187 = vsyncadd [#allocation9], %s186
          %s188 = sshll.u32 [#allocation10], 4
          %s189 = int_to_ptr.vmem [resolvable:$true] %s188
          %194 = dma.hbm_to_vmem [thread:$0]  %s2, 256, %s189, [#allocation9], 64, 64, 4
        $region20: #{siamese_lstm_final_hidden.1} parent=11 // pred_fallthru
          _
      $region12: #{siamese_lstm_final_hidden.1} parent=5 // pred_fallthru
        _
      %p195 = scmp.lt.s32.totalorder %s20, 2
      // Predicated region
      $region21: #{siamese_lstm_final_hidden.1} parent=5 // pred_check
        %p196 = pneg %p195
      $region22: #{siamese_lstm_final_hidden.1} parent=5 // pred_check_branch
        %198 = sbr.rel (%p196) target = $region24
      $region23: #{siamese_lstm_final_hidden.1} parent=5 // pred_region
        // Predicated region
        $region25: #{siamese_lstm_final_hidden.1} parent=23 // pred_check
          %p199 = pneg %p54
        $region26: #{siamese_lstm_final_hidden.1} parent=23 // pred_check_branch
          %201 = sbr.rel (%p199) target = $region28
        $region27: #{siamese_lstm_final_hidden.1} parent=23 // pred_region
          %s202 = sand.u32 %s44, 1
          %s203 = scalar_lea.sflag [#allocation6], %s202
          %s204 = sand.u32 %s44, 1
          %s205 = smul.addr %s204, 8
          %s206 = scalar_lea.vmem [#allocation5], %s205
          %s208 = ssub.s32 128, 128
          %209 = vsyncadd %s203, %s208
          %s210 = sadd.s32 %s28, %s27
          %s211 = smul.addr %s210, 128
          %s212 = scalar_lea.hbm %s0, %s211
          %s214 = sshll.u32 %s206, 4
          %s215 = int_to_ptr.vmem [resolvable:$true] %s214
          %217 = dma.hbm_to_vmem [thread:$0]  %s212, 128, %s215, %s203
        $region28: #{siamese_lstm_final_hidden.1} parent=23 // pred_fallthru
          _
        // Predicated region
        $region29: #{siamese_lstm_final_hidden.1} parent=23 // pred_check
          %p218 = pneg %p122
        $region30: #{siamese_lstm_final_hidden.1} parent=23 // pred_check_branch
          %220 = sbr.rel (%p218) target = $region32
        $region31: #{siamese_lstm_final_hidden.1} parent=23 // pred_region
          %s221 = sand.u32 %s112, 1
          %s222 = scalar_lea.sflag [#allocation12], %s221
          %s223 = sand.u32 %s112, 1
          %s224 = smul.addr %s223, 16
          %s225 = scalar_lea.vmem [#allocation11], %s224
          %s227 = ssub.s32 256, 256
          %228 = vsyncadd %s222, %s227
          %s229 = smul.addr %s27, 2
          %s230 = smul.addr %s229, 128
          %s231 = scalar_lea.hbm %s3, %s230
          %s232 = sshll.u32 %s225, 4
          %s233 = int_to_ptr.vmem [resolvable:$true] %s232
          %238 = dma.hbm_to_vmem [thread:$0]  %s231, 256, %s233, %s222, 128, 128, 8
        $region32: #{siamese_lstm_final_hidden.1} parent=23 // pred_fallthru
          _
      $region24: #{siamese_lstm_final_hidden.1} parent=5 // pred_fallthru
        _
      %p239 = scmp.le.s32.totalorder 1, %s20
      %p240 = scmp.lt.s32.totalorder %s20, 3
      %p241 = pnand %p239, %p240
      %p242 = pneg %p241
      // Predicated region
      $region33: #{siamese_lstm_final_hidden.1} parent=5 // pred_check
        _
      $region34: #{siamese_lstm_final_hidden.1} parent=5 // pred_check_branch
        %244 = sbr.rel (%p241) target = $region36
      $region35: #{siamese_lstm_final_hidden.1} parent=5 // pred_region
        %s245 = ssub.s32 %s20, 1
        %s246 = sand.u32 %s47, 1
        %s247 = scalar_lea.sflag [#allocation6], %s246
        %s248 = sand.u32 %s47, 1
        %s249 = smul.addr %s248, 8
        %s250 = scalar_lea.vmem [#allocation5], %s249
        // Predicated region
        $region37: #{siamese_lstm_final_hidden.1} parent=35 // pred_check
          %p251 = pneg %p60
        $region38: #{siamese_lstm_final_hidden.1} parent=35 // pred_check_branch
          %253 = sbr.rel (%p251) target = $region40
        $region39: #{siamese_lstm_final_hidden.1} parent=35 // pred_region
          %254 = dma.done %s247, 128
        $region40: #{siamese_lstm_final_hidden.1} parent=35 // pred_fallthru
          _
        // Predicated region
        $region41: #{siamese_lstm_final_hidden.1} parent=35 // pred_check
          %p255 = pneg %p81
        $region42: #{siamese_lstm_final_hidden.1} parent=35 // pred_check_branch
          %257 = sbr.rel (%p255) target = $region44
        $region43: #{siamese_lstm_final_hidden.1} parent=35 // pred_region
          %258 = dma.done [#allocation9], 512
        $region44: #{siamese_lstm_final_hidden.1} parent=35 // pred_fallthru
          _
        // Predicated region
        $region45: #{siamese_lstm_final_hidden.1} parent=35 // pred_check
          %p259 = pneg %p102
        $region46: #{siamese_lstm_final_hidden.1} parent=35 // pred_check_branch
          %261 = sbr.rel (%p259) target = $region48
        $region47: #{siamese_lstm_final_hidden.1} parent=35 // pred_region
          %262 = dma.done [#allocation9], 256
        $region48: #{siamese_lstm_final_hidden.1} parent=35 // pred_fallthru
          _
        %s263 = sand.u32 %s115, 1
        %s264 = scalar_lea.sflag [#allocation12], %s263
        %s265 = sand.u32 %s115, 1
        %s266 = smul.addr %s265, 16
        %s267 = scalar_lea.vmem [#allocation11], %s266
        // Predicated region
        $region49: #{siamese_lstm_final_hidden.1} parent=35 // pred_check
          %p268 = pneg %p128
        $region50: #{siamese_lstm_final_hidden.1} parent=35 // pred_check_branch
          %270 = sbr.rel (%p268) target = $region52
        $region51: #{siamese_lstm_final_hidden.1} parent=35 // pred_region
          %271 = dma.done %s264, 256
        $region52: #{siamese_lstm_final_hidden.1} parent=35 // pred_fallthru
          _
        %s272 = sand.u32 %s47, 1
        %s273 = scalar_lea.sflag [#allocation6], %s272
        %s274 = sand.u32 %s47, 1
        %s275 = smul.addr %s274, 8
        %s276 = scalar_lea.vmem [#allocation5], %s275
        %p277 = pneg %p60
        %p278 = pneg %p57
        %p279 = pneg %p81
        %p280 = pneg %p78
        %p281 = pneg %p102
        %p282 = pneg %p99
        %s283 = sand.u32 %s115, 1
        %s284 = scalar_lea.sflag [#allocation12], %s283
        %s285 = sand.u32 %s115, 1
        %s286 = smul.addr %s285, 16
        %s287 = scalar_lea.vmem [#allocation11], %s286
        %p288 = pneg %p128
        %p289 = pneg %p125
        %p290 = pneg %p154
        %p291 = pneg %p151
        %s292 = sand.u32 %s141, 1
        %s293 = scalar_lea.sflag [#allocation7], %s292
        %s294 = sand.u32 %s141, 1
        %s295 = smul.addr %s294, 8
        %s296 = scalar_lea.vmem [#allocation13], %s295
        %p298 = scmp.eq.s32.totalorder %s30, 0
        // Predicated region
        $region53: #{siamese_lstm_final_hidden.1} parent=35 // pred_check
          %p299 = pneg %p298
        $region54: #{siamese_lstm_final_hidden.1} parent=35 // pred_check_branch
          %301 = sbr.rel (%p299) target = $region56
        $region55: #{siamese_lstm_final_hidden.1} parent=35 // pred_region
          %v302 = vld [vmem:[%s267] sm:$0xff]
          %vm303 = vcmask 261120
          %304 = vst.msk [vmem:[#allocation2] sm:$0xff] %vm303, %v302
          %s305 = scalar_lea.vmem %s267, 8 [#allocation11]
          %v306 = vld [vmem:[%s305] sm:$0xff]
          %307 = vst.msk [vmem:[#allocation3] sm:$0xff] %vm303, %v306
        $region56: #{siamese_lstm_final_hidden.1} parent=35 // pred_fallthru
          _
        %v308 = vld [vmem:[%s250] sm:$0xff]
        %v309 = vlaneseq
        %v310 = vshrl.u32 %v309, 7
        %v311 = vsub.s32 0, %v310
        %v312 = vrot.slane %v308, %v311
        %314 = vbcast.lane.b32.xlu0 %v312, 256
        %v315 = vpop.permute.xlu0 %314
        %v316 = vlaneseq
        %v317 = vshrl.u32 %v316, 7
        %v318 = vsub.s32 1, %v317
        %v319 = vrot.slane %v308, %v318
        %321 = vbcast.lane.b32.xlu0 %v319, 256
        %v322 = vpop.permute.xlu0 %321
        %v323 = vlaneseq
        %v324 = vshrl.u32 %v323, 7
        %v325 = vsub.s32 2, %v324
        %v326 = vrot.slane %v308, %v325
        %328 = vbcast.lane.b32.xlu0 %v326, 256
        %v329 = vpop.permute.xlu0 %328
        %v330 = vlaneseq
        %v331 = vshrl.u32 %v330, 7
        %v332 = vsub.s32 3, %v331
        %v333 = vrot.slane %v308, %v332
        %335 = vbcast.lane.b32.xlu0 %v333, 256
        %v336 = vpop.permute.xlu0 %335
        %v337 = vlaneseq
        %v338 = vshrl.u32 %v337, 7
        %v339 = vsub.s32 4, %v338
        %v340 = vrot.slane %v308, %v339
        %342 = vbcast.lane.b32.xlu0 %v340, 256
        %v343 = vpop.permute.xlu0 %342
        %v344 = vlaneseq
        %v345 = vshrl.u32 %v344, 7
        %v346 = vsub.s32 5, %v345
        %v347 = vrot.slane %v308, %v346
        %349 = vbcast.lane.b32.xlu0 %v347, 256
        %v350 = vpop.permute.xlu0 %349
        %v351 = vlaneseq
        %v352 = vshrl.u32 %v351, 7
        %v353 = vsub.s32 6, %v352
        %v354 = vrot.slane %v308, %v353
        %356 = vbcast.lane.b32.xlu0 %v354, 256
        %v357 = vpop.permute.xlu0 %356
        %v358 = vlaneseq
        %v359 = vshrl.u32 %v358, 7
        %v360 = vsub.s32 7, %v359
        %v361 = vrot.slane %v308, %v360
        %363 = vbcast.lane.b32.xlu0 %v361, 256
        %v364 = vpop.permute.xlu0 %363
        %v365 = vlaneseq
        %v366 = vand.u32 %v365, 127
        %vm367 = vcmp.eq.s32.totalorder %v315, %v366
        %vm368 = vcmp.eq.s32.totalorder %v322, %v366
        %vm369 = vcmp.eq.s32.totalorder %v329, %v366
        %vm370 = vcmp.eq.s32.totalorder %v336, %v366
        %vm371 = vcmp.eq.s32.totalorder %v343, %v366
        %vm372 = vcmp.eq.s32.totalorder %v350, %v366
        %vm373 = vcmp.eq.s32.totalorder %v357, %v366
        %vm374 = vcmp.eq.s32.totalorder %v364, %v366
        %v375 = vsel %vm367, 1, 0
        %v376 = vsel %vm368, 1, 0
        %v377 = vsel %vm369, 1, 0
        %v378 = vsel %vm370, 1, 0
        %v379 = vsel %vm371, 1, 0
        %v380 = vsel %vm372, 1, 0
        %v381 = vsel %vm373, 1, 0
        %v382 = vsel %vm374, 1, 0
        %v383 = vcvt.s32.f32 %v375
        %v384 = vcvt.s32.f32 %v376
        %v385 = vcvt.s32.f32 %v377
        %v386 = vcvt.s32.f32 %v378
        %v387 = vcvt.s32.f32 %v379
        %v388 = vcvt.s32.f32 %v380
        %v389 = vcvt.s32.f32 %v381
        %v390 = vcvt.s32.f32 %v382
        %v391 = vpack.c.bf16 %v383, %v383
        %v392 = vpack.c.bf16 %v384, %v384
        %v393 = vpack.c.bf16 %v385, %v385
        %v394 = vpack.c.bf16 %v386, %v386
        %v395 = vpack.c.bf16 %v387, %v387
        %v396 = vpack.c.bf16 %v388, %v388
        %v397 = vpack.c.bf16 %v389, %v389
        %v398 = vpack.c.bf16 %v390, %v390
        %v399 = vld [vmem:[#allocation8] sm:$0xf]
        %v400 = vld [vmem:[#allocation8 + $0x4] sm:$0xf]
        %v401 = vld [vmem:[#allocation8 + $0x8] sm:$0xf]
        %v402 = vld [vmem:[#allocation8 + $0xc] sm:$0xf]
        %v403 = vld [vmem:[#allocation8 + $0x10] sm:$0xf]
        %v404 = vld [vmem:[#allocation8 + $0x14] sm:$0xf]
        %v405 = vld [vmem:[#allocation8 + $0x18] sm:$0xf]
        %v406 = vld [vmem:[#allocation8 + $0x1c] sm:$0xf]
        %v415 = vunpack.c.l.b16 %v391
        %v416 = vunpack.c.l.b16 %v392
        %v417 = vunpack.c.l.b16 %v393
        %v418 = vunpack.c.l.b16 %v394
        %v419 = vunpack.c.l.b16 %v395
        %v420 = vunpack.c.l.b16 %v396
        %v421 = vunpack.c.l.b16 %v397
        %v422 = vunpack.c.l.b16 %v398
        %v423 = vpack.c.b16 %v416, %v415
        %v424 = vpack.c.b16 %v418, %v417
        %v425 = vpack.c.b16 %v420, %v419
        %v426 = vpack.c.b16 %v422, %v421
        %v435 = vunpack.c.l.b16 %v399
        %v436 = vunpack.c.l.b16 %v400
        %v437 = vunpack.c.l.b16 %v401
        %v438 = vunpack.c.l.b16 %v402
        %v439 = vunpack.c.l.b16 %v403
        %v440 = vunpack.c.l.b16 %v404
        %v441 = vunpack.c.l.b16 %v405
        %v442 = vunpack.c.l.b16 %v406
        %v443 = vpack.c.b16 %v436, %v435
        %v444 = vpack.c.b16 %v438, %v437
        %v445 = vpack.c.b16 %v440, %v439
        %v446 = vpack.c.b16 %v442, %v441
        %vm451 = vcmask 523264
        %v453 = vsel %vm451, %v423, 0
        %v456 = vsel %vm451, %v424, 0
        %v459 = vsel %vm451, %v425, 0
        %v462 = vsel %vm451, %v426, 0
        %464 = vmatprep.subr.bf16.mxu0 0
        %465 = vmatpush1.bf16.msra.mxu0 %v443
        %466 = vmatprep.subr.bf16.mxu0 0
        %467 = vmatpush1.bf16.msra.mxu0 %v444
        %468 = vmatprep.subr.bf16.mxu0 0
        %469 = vmatpush1.bf16.msra.mxu0 %v445
        %470 = vmatprep.subr.bf16.mxu0 0
        %471 = vmatpush1.bf16.msra.mxu0 %v446
        %472 = vmatprep.subr.bf16.mxu0 0
        %473 = vmatpush1.bf16.msra.mxu0 0
        %474 = vmatprep.subr.bf16.mxu0 0
        %475 = vmatpush1.bf16.msra.mxu0 0
        %476 = vmatprep.subr.bf16.mxu0 0
        %477 = vmatpush1.bf16.msra.mxu0 0
        %478 = vmatprep.subr.bf16.mxu0 0
        %479 = vmatpush1.bf16.msra.mxu0 0
        %480 = vmatprep.subr.bf16.mxu0 0
        %481 = vmatpush1.bf16.msra.mxu0 0
        %482 = vmatprep.subr.bf16.mxu0 0
        %483 = vmatpush1.bf16.msra.mxu0 0
        %484 = vmatprep.subr.bf16.mxu0 0
        %485 = vmatpush1.bf16.msra.mxu0 0
        %486 = vmatprep.subr.bf16.mxu0 0
        %487 = vmatpush1.bf16.msra.mxu0 0
        %488 = vmatprep.subr.bf16.mxu0 0
        %489 = vmatpush1.bf16.msra.mxu0 0
        %490 = vmatprep.subr.bf16.mxu0 0
        %491 = vmatpush1.bf16.msra.mxu0 0
        %492 = vmatprep.subr.bf16.mxu0 0
        %493 = vmatpush1.bf16.msra.mxu0 0
        %494 = vmatprep.subr.bf16.mxu0 0
        %495 = vmatpush1.bf16.msra.mxu0 0
        %496 = vmatprep.mubr.bf16.mxu0 0
        %497 = vmatmul.mubr.bf16.gmra.mrb[0].mxu0 %v453
        %v498 = vpop.f32.mrb[0].mxu0
        %v499 = vadd.f32 0.0, %v498
        %v500 = vpop.f32.mrb[0].mxu0
        %v501 = vpop.f32.mrb[0].mxu0
        %v502 = vadd.f32 0.0, %v501
        %v503 = vpop.f32.mrb[0].mxu0
        %504 = vmatprep.mubr.bf16.mxu0 0
        %505 = vmatmul.mubr.bf16.gmra.mrb[0].mxu0 %v456
        %v506 = vpop.f32.mrb[0].mxu0
        %v507 = vadd.f32 0.0, %v506
        %v508 = vpop.f32.mrb[0].mxu0
        %v509 = vpop.f32.mrb[0].mxu0
        %v510 = vadd.f32 0.0, %v509
        %v511 = vpop.f32.mrb[0].mxu0
        %512 = vmatprep.mubr.bf16.mxu0 0
        %513 = vmatmul.mubr.bf16.gmra.mrb[0].mxu0 %v459
        %v514 = vpop.f32.mrb[0].mxu0
        %v515 = vadd.f32 0.0, %v514
        %v516 = vpop.f32.mrb[0].mxu0
        %v517 = vpop.f32.mrb[0].mxu0
        %v518 = vadd.f32 0.0, %v517
        %v519 = vpop.f32.mrb[0].mxu0
        %520 = vmatprep.mubr.bf16.mxu0 0
        %521 = vmatmul.mubr.bf16.gmra.mrb[0].mxu0 %v462
        %v522 = vpop.f32.mrb[0].mxu0
        %v523 = vadd.f32 0.0, %v522
        %v524 = vpop.f32.mrb[0].mxu0
        %v525 = vpop.f32.mrb[0].mxu0
        %v526 = vadd.f32 0.0, %v525
        %v527 = vpop.f32.mrb[0].mxu0
        %528 = vdwg.mxu0
        %529 = vst [vmem:[#allocation4] sm:$0xff] %v499
        %530 = vst [vmem:[#allocation4 + $0x8] sm:$0xff] %v502
        %531 = vst [vmem:[#allocation4 + $0x10] sm:$0xff] %v507
        %532 = vst [vmem:[#allocation4 + $0x18] sm:$0xff] %v510
        %533 = vst [vmem:[#allocation4 + $0x20] sm:$0xff] %v515
        %534 = vst [vmem:[#allocation4 + $0x28] sm:$0xff] %v518
        %535 = vst [vmem:[#allocation4 + $0x30] sm:$0xff] %v523
        %536 = vst [vmem:[#allocation4 + $0x38] sm:$0xff] %v526
        %v537 = vld [vmem:[#allocation10] sm:$0xf]
        %v538 = vld [vmem:[#allocation10 + $0x4] sm:$0xf]
        %v539 = vld [vmem:[#allocation10 + $0x8] sm:$0xf]
        %v540 = vld [vmem:[#allocation10 + $0xc] sm:$0xf]
        %vm541 = vcmp.ge.s32.totalorder %v366, 64
        %vm542 = vcmp.lt.s32.totalorder %v366, 96
        %vm543 = vmand %vm541, %vm542
        %v544 = vld [vmem:[#allocation2] sm:$0xff]
        %v545 = vld [vmem:[#allocation3] sm:$0xff]
        %v546 = vld [vmem:[#allocation4] sm:$0xff]
        %v547 = vpack.c.bf16 %v544, %v544
        %v552 = vunpack.c.l.b16 %v537
        %v553 = vunpack.c.l.b16 %v538
        %v554 = vunpack.c.l.b16 %v539
        %v555 = vunpack.c.l.b16 %v540
        %v556 = vpack.c.b16 %v553, %v552
        %v557 = vpack.c.b16 %v555, %v554
        %vm560 = vcmask 261120
        %v562 = vsel %vm560, %v547, 0
        %564 = vmatprep.subr.bf16.mxu0 0
        %565 = vmatpush1.bf16.msra.mxu0 %v556
        %566 = vmatprep.subr.bf16.mxu0 0
        %567 = vmatpush1.bf16.msra.mxu0 %v557
        %568 = vmatprep.subr.bf16.mxu0 0
        %569 = vmatpush1.bf16.msra.mxu0 0
        %570 = vmatprep.subr.bf16.mxu0 0
        %571 = vmatpush1.bf16.msra.mxu0 0
        %572 = vmatprep.subr.bf16.mxu0 0
        %573 = vmatpush1.bf16.msra.mxu0 0
        %574 = vmatprep.subr.bf16.mxu0 0
        %575 = vmatpush1.bf16.msra.mxu0 0
        %576 = vmatprep.subr.bf16.mxu0 0
        %577 = vmatpush1.bf16.msra.mxu0 0
        %578 = vmatprep.subr.bf16.mxu0 0
        %579 = vmatpush1.bf16.msra.mxu0 0
        %580 = vmatprep.subr.bf16.mxu0 0
        %581 = vmatpush1.bf16.msra.mxu0 0
        %582 = vmatprep.subr.bf16.mxu0 0
        %583 = vmatpush1.bf16.msra.mxu0 0
        %584 = vmatprep.subr.bf16.mxu0 0
        %585 = vmatpush1.bf16.msra.mxu0 0
        %586 = vmatprep.subr.bf16.mxu0 0
        %587 = vmatpush1.bf16.msra.mxu0 0
        %588 = vmatprep.subr.bf16.mxu0 0
        %589 = vmatpush1.bf16.msra.mxu0 0
        %590 = vmatprep.subr.bf16.mxu0 0
        %591 = vmatpush1.bf16.msra.mxu0 0
        %592 = vmatprep.subr.bf16.mxu0 0
        %593 = vmatpush1.bf16.msra.mxu0 0
        %594 = vmatprep.subr.bf16.mxu0 0
        %595 = vmatpush1.bf16.msra.mxu0 0
        %596 = vmatprep.mubr.bf16.mxu0 0
        %597 = vmatmul.mubr.bf16.gmra.mrb[0].mxu0 %v562
        %v598 = vpop.f32.mrb[0].mxu0
        %v599 = vadd.f32 0.0, %v598
        %v600 = vpop.f32.mrb[0].mxu0
        %v601 = vpop.f32.mrb[0].mxu0
        %v602 = vpop.f32.mrb[0].mxu0
        %603 = vdwg.mxu0
        %v604 = vadd.f32 %v546, %v599
        %v605 = vtanh.pop %v604
        %v606 = vxor.u32 %v604, 2147483648
        %v607 = vmul.f32 %v606, 1.442695
        %v608 = vpow.pop %v607
        %v609 = vadd.f32 %v608, 1.0
        %v610 = vrcp.pop %v609
        %v611 = vmul.f32 1.0, %v610
        %v612 = vsel %vm543, %v605, %v611
        %614 = vrot.lane.b32.xlu0 %v545, 32
        %v615 = vpop.permute.xlu0 %614
        %v617 = vmul.f32 %v612, %v615
        %619 = vrot.lane.b32.xlu0 %v612, 64
        %v620 = vpop.permute.xlu0 %619
        %v622 = vmul.f32 %v612, %v620
        %624 = vrot.lane.b32.xlu0 %v622, 32
        %v625 = vpop.permute.xlu0 %624
        %v627 = vadd.f32 %v617, %v625
        %v628 = vtanh.pop %v627
        %630 = vrot.lane.b32.xlu0 %v628, 64
        %v631 = vpop.permute.xlu0 %630
        %v633 = vmul.f32 %v612, %v631
        %s634 = scalar_lea.vmem [#allocation4], 8
        %v635 = vld [vmem:[%s634] sm:$0xff]
        %v636 = vpack.c.bf16 %v633, %v633
        %638 = vrot.lane.b32.xlu0 %v636, 32
        %v639 = vpop.permute.xlu0 %638
        %v641 = vsel %vm560, %v639, 0
        %643 = vmatprep.subr.bf16.mxu0 0
        %644 = vmatpush1.bf16.msra.mxu0 %v556
        %645 = vmatprep.subr.bf16.mxu0 0
        %646 = vmatpush1.bf16.msra.mxu0 %v557
        %647 = vmatprep.subr.bf16.mxu0 0
        %648 = vmatpush1.bf16.msra.mxu0 0
        %649 = vmatprep.subr.bf16.mxu0 0
        %650 = vmatpush1.bf16.msra.mxu0 0
        %651 = vmatprep.subr.bf16.mxu0 0
        %652 = vmatpush1.bf16.msra.mxu0 0
        %653 = vmatprep.subr.bf16.mxu0 0
        %654 = vmatpush1.bf16.msra.mxu0 0
        %655 = vmatprep.subr.bf16.mxu0 0
        %656 = vmatpush1.bf16.msra.mxu0 0
        %657 = vmatprep.subr.bf16.mxu0 0
        %658 = vmatpush1.bf16.msra.mxu0 0
        %659 = vmatprep.subr.bf16.mxu0 0
        %660 = vmatpush1.bf16.msra.mxu0 0
        %661 = vmatprep.subr.bf16.mxu0 0
        %662 = vmatpush1.bf16.msra.mxu0 0
        %663 = vmatprep.subr.bf16.mxu0 0
        %664 = vmatpush1.bf16.msra.mxu0 0
        %665 = vmatprep.subr.bf16.mxu0 0
        %666 = vmatpush1.bf16.msra.mxu0 0
        %667 = vmatprep.subr.bf16.mxu0 0
        %668 = vmatpush1.bf16.msra.mxu0 0
        %669 = vmatprep.subr.bf16.mxu0 0
        %670 = vmatpush1.bf16.msra.mxu0 0
        %671 = vmatprep.subr.bf16.mxu0 0
        %672 = vmatpush1.bf16.msra.mxu0 0
        %673 = vmatprep.subr.bf16.mxu0 0
        %674 = vmatpush1.bf16.msra.mxu0 0
        %675 = vmatprep.mubr.bf16.mxu0 0
        %676 = vmatmul.mubr.bf16.gmra.mrb[0].mxu0 %v641
        %v677 = vpop.f32.mrb[0].mxu0
        %v678 = vadd.f32 0.0, %v677
        %v679 = vpop.f32.mrb[0].mxu0
        %v680 = vpop.f32.mrb[0].mxu0
        %v681 = vpop.f32.mrb[0].mxu0
        %682 = vdwg.mxu0
        %v683 = vadd.f32 %v635, %v678
        %v684 = vtanh.pop %v683
        %v685 = vxor.u32 %v683, 2147483648
        %v686 = vmul.f32 %v685, 1.442695
        %v687 = vpow.pop %v686
        %v688 = vadd.f32 %v687, 1.0
        %v689 = vrcp.pop %v688
        %v690 = vmul.f32 1.0, %v689
        %v691 = vsel %vm543, %v684, %v690
        %v692 = vmul.f32 %v691, %v627
        %694 = vrot.lane.b32.xlu0 %v691, 64
        %v695 = vpop.permute.xlu0 %694
        %v697 = vmul.f32 %v691, %v695
        %699 = vrot.lane.b32.xlu0 %v697, 32
        %v700 = vpop.permute.xlu0 %699
        %v702 = vadd.f32 %v692, %v700
        %v703 = vtanh.pop %v702
        %705 = vrot.lane.b32.xlu0 %v703, 64
        %v706 = vpop.permute.xlu0 %705
        %v708 = vmul.f32 %v691, %v706
        %s709 = scalar_lea.vmem [#allocation4], 16
        %v710 = vld [vmem:[%s709] sm:$0xff]
        %v711 = vpack.c.bf16 %v708, %v708
        %713 = vrot.lane.b32.xlu0 %v711, 32
        %v714 = vpop.permute.xlu0 %713
        %v716 = vsel %vm560, %v714, 0
        %718 = vmatprep.subr.bf16.mxu0 0
        %719 = vmatpush1.bf16.msra.mxu0 %v556
        %720 = vmatprep.subr.bf16.mxu0 0
        %721 = vmatpush1.bf16.msra.mxu0 %v557
        %722 = vmatprep.subr.bf16.mxu0 0
        %723 = vmatpush1.bf16.msra.mxu0 0
        %724 = vmatprep.subr.bf16.mxu0 0
        %725 = vmatpush1.bf16.msra.mxu0 0
        %726 = vmatprep.subr.bf16.mxu0 0
        %727 = vmatpush1.bf16.msra.mxu0 0
        %728 = vmatprep.subr.bf16.mxu0 0
        %729 = vmatpush1.bf16.msra.mxu0 0
        %730 = vmatprep.subr.bf16.mxu0 0
        %731 = vmatpush1.bf16.msra.mxu0 0
        %732 = vmatprep.subr.bf16.mxu0 0
        %733 = vmatpush1.bf16.msra.mxu0 0
        %734 = vmatprep.subr.bf16.mxu0 0
        %735 = vmatpush1.bf16.msra.mxu0 0
        %736 = vmatprep.subr.bf16.mxu0 0
        %737 = vmatpush1.bf16.msra.mxu0 0
        %738 = vmatprep.subr.bf16.mxu0 0
        %739 = vmatpush1.bf16.msra.mxu0 0
        %740 = vmatprep.subr.bf16.mxu0 0
        %741 = vmatpush1.bf16.msra.mxu0 0
        %742 = vmatprep.subr.bf16.mxu0 0
        %743 = vmatpush1.bf16.msra.mxu0 0
        %744 = vmatprep.subr.bf16.mxu0 0
        %745 = vmatpush1.bf16.msra.mxu0 0
        %746 = vmatprep.subr.bf16.mxu0 0
        %747 = vmatpush1.bf16.msra.mxu0 0
        %748 = vmatprep.subr.bf16.mxu0 0
        %749 = vmatpush1.bf16.msra.mxu0 0
        %750 = vmatprep.mubr.bf16.mxu0 0
        %751 = vmatmul.mubr.bf16.gmra.mrb[0].mxu0 %v716
        %v752 = vpop.f32.mrb[0].mxu0
        %v753 = vadd.f32 0.0, %v752
        %v754 = vpop.f32.mrb[0].mxu0
        %v755 = vpop.f32.mrb[0].mxu0
        %v756 = vpop.f32.mrb[0].mxu0
        %757 = vdwg.mxu0
        %v758 = vadd.f32 %v710, %v753
        %v759 = vtanh.pop %v758
        %v760 = vxor.u32 %v758, 2147483648
        %v761 = vmul.f32 %v760, 1.442695
        %v762 = vpow.pop %v761
        %v763 = vadd.f32 %v762, 1.0
        %v764 = vrcp.pop %v763
        %v765 = vmul.f32 1.0, %v764
        %v766 = vsel %vm543, %v759, %v765
        %v767 = vmul.f32 %v766, %v702
        %769 = vrot.lane.b32.xlu0 %v766, 64
        %v770 = vpop.permute.xlu0 %769
        %v772 = vmul.f32 %v766, %v770
        %774 = vrot.lane.b32.xlu0 %v772, 32
        %v775 = vpop.permute.xlu0 %774
        %v777 = vadd.f32 %v767, %v775
        %v778 = vtanh.pop %v777
        %780 = vrot.lane.b32.xlu0 %v778, 64
        %v781 = vpop.permute.xlu0 %780
        %v783 = vmul.f32 %v766, %v781
        %s784 = scalar_lea.vmem [#allocation4], 24
        %v785 = vld [vmem:[%s784] sm:$0xff]
        %v786 = vpack.c.bf16 %v783, %v783
        %788 = vrot.lane.b32.xlu0 %v786, 32
        %v789 = vpop.permute.xlu0 %788
        %v791 = vsel %vm560, %v789, 0
        %793 = vmatprep.subr.bf16.mxu0 0
        %794 = vmatpush1.bf16.msra.mxu0 %v556
        %795 = vmatprep.subr.bf16.mxu0 0
        %796 = vmatpush1.bf16.msra.mxu0 %v557
        %797 = vmatprep.subr.bf16.mxu0 0
        %798 = vmatpush1.bf16.msra.mxu0 0
        %799 = vmatprep.subr.bf16.mxu0 0
        %800 = vmatpush1.bf16.msra.mxu0 0
        %801 = vmatprep.subr.bf16.mxu0 0
        %802 = vmatpush1.bf16.msra.mxu0 0
        %803 = vmatprep.subr.bf16.mxu0 0
        %804 = vmatpush1.bf16.msra.mxu0 0
        %805 = vmatprep.subr.bf16.mxu0 0
        %806 = vmatpush1.bf16.msra.mxu0 0
        %807 = vmatprep.subr.bf16.mxu0 0
        %808 = vmatpush1.bf16.msra.mxu0 0
        %809 = vmatprep.subr.bf16.mxu0 0
        %810 = vmatpush1.bf16.msra.mxu0 0
        %811 = vmatprep.subr.bf16.mxu0 0
        %812 = vmatpush1.bf16.msra.mxu0 0
        %813 = vmatprep.subr.bf16.mxu0 0
        %814 = vmatpush1.bf16.msra.mxu0 0
        %815 = vmatprep.subr.bf16.mxu0 0
        %816 = vmatpush1.bf16.msra.mxu0 0
        %817 = vmatprep.subr.bf16.mxu0 0
        %818 = vmatpush1.bf16.msra.mxu0 0
        %819 = vmatprep.subr.bf16.mxu0 0
        %820 = vmatpush1.bf16.msra.mxu0 0
        %821 = vmatprep.subr.bf16.mxu0 0
        %822 = vmatpush1.bf16.msra.mxu0 0
        %823 = vmatprep.subr.bf16.mxu0 0
        %824 = vmatpush1.bf16.msra.mxu0 0
        %825 = vmatprep.mubr.bf16.mxu0 0
        %826 = vmatmul.mubr.bf16.gmra.mrb[0].mxu0 %v791
        %v827 = vpop.f32.mrb[0].mxu0
        %v828 = vadd.f32 0.0, %v827
        %v829 = vpop.f32.mrb[0].mxu0
        %v830 = vpop.f32.mrb[0].mxu0
        %v831 = vpop.f32.mrb[0].mxu0
        %832 = vdwg.mxu0
        %v833 = vadd.f32 %v785, %v828
        %v834 = vtanh.pop %v833
        %v835 = vxor.u32 %v833, 2147483648
        %v836 = vmul.f32 %v835, 1.442695
        %v837 = vpow.pop %v836
        %v838 = vadd.f32 %v837, 1.0
        %v839 = vrcp.pop %v838
        %v840 = vmul.f32 1.0, %v839
        %v841 = vsel %vm543, %v834, %v840
        %v842 = vmul.f32 %v841, %v777
        %844 = vrot.lane.b32.xlu0 %v841, 64
        %v845 = vpop.permute.xlu0 %844
        %v847 = vmul.f32 %v841, %v845
        %849 = vrot.lane.b32.xlu0 %v847, 32
        %v850 = vpop.permute.xlu0 %849
        %v852 = vadd.f32 %v842, %v850
        %v853 = vtanh.pop %v852
        %855 = vrot.lane.b32.xlu0 %v853, 64
        %v856 = vpop.permute.xlu0 %855
        %v858 = vmul.f32 %v841, %v856
        %s859 = scalar_lea.vmem [#allocation4], 32
        %v860 = vld [vmem:[%s859] sm:$0xff]
        %v861 = vpack.c.bf16 %v858, %v858
        %863 = vrot.lane.b32.xlu0 %v861, 32
        %v864 = vpop.permute.xlu0 %863
        %v866 = vsel %vm560, %v864, 0
        %868 = vmatprep.subr.bf16.mxu0 0
        %869 = vmatpush1.bf16.msra.mxu0 %v556
        %870 = vmatprep.subr.bf16.mxu0 0
        %871 = vmatpush1.bf16.msra.mxu0 %v557
        %872 = vmatprep.subr.bf16.mxu0 0
        %873 = vmatpush1.bf16.msra.mxu0 0
        %874 = vmatprep.subr.bf16.mxu0 0
        %875 = vmatpush1.bf16.msra.mxu0 0
        %876 = vmatprep.subr.bf16.mxu0 0
        %877 = vmatpush1.bf16.msra.mxu0 0
        %878 = vmatprep.subr.bf16.mxu0 0
        %879 = vmatpush1.bf16.msra.mxu0 0
        %880 = vmatprep.subr.bf16.mxu0 0
        %881 = vmatpush1.bf16.msra.mxu0 0
        %882 = vmatprep.subr.bf16.mxu0 0
        %883 = vmatpush1.bf16.msra.mxu0 0
        %884 = vmatprep.subr.bf16.mxu0 0
        %885 = vmatpush1.bf16.msra.mxu0 0
        %886 = vmatprep.subr.bf16.mxu0 0
        %887 = vmatpush1.bf16.msra.mxu0 0
        %888 = vmatprep.subr.bf16.mxu0 0
        %889 = vmatpush1.bf16.msra.mxu0 0
        %890 = vmatprep.subr.bf16.mxu0 0
        %891 = vmatpush1.bf16.msra.mxu0 0
        %892 = vmatprep.subr.bf16.mxu0 0
        %893 = vmatpush1.bf16.msra.mxu0 0
        %894 = vmatprep.subr.bf16.mxu0 0
        %895 = vmatpush1.bf16.msra.mxu0 0
        %896 = vmatprep.subr.bf16.mxu0 0
        %897 = vmatpush1.bf16.msra.mxu0 0
        %898 = vmatprep.subr.bf16.mxu0 0
        %899 = vmatpush1.bf16.msra.mxu0 0
        %900 = vmatprep.mubr.bf16.mxu0 0
        %901 = vmatmul.mubr.bf16.gmra.mrb[0].mxu0 %v866
        %v902 = vpop.f32.mrb[0].mxu0
        %v903 = vadd.f32 0.0, %v902
        %v904 = vpop.f32.mrb[0].mxu0
        %v905 = vpop.f32.mrb[0].mxu0
        %v906 = vpop.f32.mrb[0].mxu0
        %907 = vdwg.mxu0
        %v908 = vadd.f32 %v860, %v903
        %v909 = vtanh.pop %v908
        %v910 = vxor.u32 %v908, 2147483648
        %v911 = vmul.f32 %v910, 1.442695
        %v912 = vpow.pop %v911
        %v913 = vadd.f32 %v912, 1.0
        %v914 = vrcp.pop %v913
        %v915 = vmul.f32 1.0, %v914
        %v916 = vsel %vm543, %v909, %v915
        %v917 = vmul.f32 %v916, %v852
        %919 = vrot.lane.b32.xlu0 %v916, 64
        %v920 = vpop.permute.xlu0 %919
        %v922 = vmul.f32 %v916, %v920
        %924 = vrot.lane.b32.xlu0 %v922, 32
        %v925 = vpop.permute.xlu0 %924
        %v927 = vadd.f32 %v917, %v925
        %v928 = vtanh.pop %v927
        %930 = vrot.lane.b32.xlu0 %v928, 64
        %v931 = vpop.permute.xlu0 %930
        %v933 = vmul.f32 %v916, %v931
        %s934 = scalar_lea.vmem [#allocation4], 40
        %v935 = vld [vmem:[%s934] sm:$0xff]
        %v936 = vpack.c.bf16 %v933, %v933
        %938 = vrot.lane.b32.xlu0 %v936, 32
        %v939 = vpop.permute.xlu0 %938
        %v941 = vsel %vm560, %v939, 0
        %943 = vmatprep.subr.bf16.mxu0 0
        %944 = vmatpush1.bf16.msra.mxu0 %v556
        %945 = vmatprep.subr.bf16.mxu0 0
        %946 = vmatpush1.bf16.msra.mxu0 %v557
        %947 = vmatprep.subr.bf16.mxu0 0
        %948 = vmatpush1.bf16.msra.mxu0 0
        %949 = vmatprep.subr.bf16.mxu0 0
        %950 = vmatpush1.bf16.msra.mxu0 0
        %951 = vmatprep.subr.bf16.mxu0 0
        %952 = vmatpush1.bf16.msra.mxu0 0
        %953 = vmatprep.subr.bf16.mxu0 0
        %954 = vmatpush1.bf16.msra.mxu0 0
        %955 = vmatprep.subr.bf16.mxu0 0
        %956 = vmatpush1.bf16.msra.mxu0 0
        %957 = vmatprep.subr.bf16.mxu0 0
        %958 = vmatpush1.bf16.msra.mxu0 0
        %959 = vmatprep.subr.bf16.mxu0 0
        %960 = vmatpush1.bf16.msra.mxu0 0
        %961 = vmatprep.subr.bf16.mxu0 0
        %962 = vmatpush1.bf16.msra.mxu0 0
        %963 = vmatprep.subr.bf16.mxu0 0
        %964 = vmatpush1.bf16.msra.mxu0 0
        %965 = vmatprep.subr.bf16.mxu0 0
        %966 = vmatpush1.bf16.msra.mxu0 0
        %967 = vmatprep.subr.bf16.mxu0 0
        %968 = vmatpush1.bf16.msra.mxu0 0
        %969 = vmatprep.subr.bf16.mxu0 0
        %970 = vmatpush1.bf16.msra.mxu0 0
        %971 = vmatprep.subr.bf16.mxu0 0
        %972 = vmatpush1.bf16.msra.mxu0 0
        %973 = vmatprep.subr.bf16.mxu0 0
        %974 = vmatpush1.bf16.msra.mxu0 0
        %975 = vmatprep.mubr.bf16.mxu0 0
        %976 = vmatmul.mubr.bf16.gmra.mrb[0].mxu0 %v941
        %v977 = vpop.f32.mrb[0].mxu0
        %v978 = vadd.f32 0.0, %v977
        %v979 = vpop.f32.mrb[0].mxu0
        %v980 = vpop.f32.mrb[0].mxu0
        %v981 = vpop.f32.mrb[0].mxu0
        %982 = vdwg.mxu0
        %v983 = vadd.f32 %v935, %v978
        %v984 = vtanh.pop %v983
        %v985 = vxor.u32 %v983, 2147483648
        %v986 = vmul.f32 %v985, 1.442695
        %v987 = vpow.pop %v986
        %v988 = vadd.f32 %v987, 1.0
        %v989 = vrcp.pop %v988
        %v990 = vmul.f32 1.0, %v989
        %v991 = vsel %vm543, %v984, %v990
        %v992 = vmul.f32 %v991, %v927
        %994 = vrot.lane.b32.xlu0 %v991, 64
        %v995 = vpop.permute.xlu0 %994
        %v997 = vmul.f32 %v991, %v995
        %999 = vrot.lane.b32.xlu0 %v997, 32
        %v1000 = vpop.permute.xlu0 %999
        %v1002 = vadd.f32 %v992, %v1000
        %v1003 = vtanh.pop %v1002
        %1005 = vrot.lane.b32.xlu0 %v1003, 64
        %v1006 = vpop.permute.xlu0 %1005
        %v1008 = vmul.f32 %v991, %v1006
        %s1009 = scalar_lea.vmem [#allocation4], 48
        %v1010 = vld [vmem:[%s1009] sm:$0xff]
        %v1011 = vpack.c.bf16 %v1008, %v1008
        %1013 = vrot.lane.b32.xlu0 %v1011, 32
        %v1014 = vpop.permute.xlu0 %1013
        %v1016 = vsel %vm560, %v1014, 0
        %1018 = vmatprep.subr.bf16.mxu0 0
        %1019 = vmatpush1.bf16.msra.mxu0 %v556
        %1020 = vmatprep.subr.bf16.mxu0 0
        %1021 = vmatpush1.bf16.msra.mxu0 %v557
        %1022 = vmatprep.subr.bf16.mxu0 0
        %1023 = vmatpush1.bf16.msra.mxu0 0
        %1024 = vmatprep.subr.bf16.mxu0 0
        %1025 = vmatpush1.bf16.msra.mxu0 0
        %1026 = vmatprep.subr.bf16.mxu0 0
        %1027 = vmatpush1.bf16.msra.mxu0 0
        %1028 = vmatprep.subr.bf16.mxu0 0
        %1029 = vmatpush1.bf16.msra.mxu0 0
        %1030 = vmatprep.subr.bf16.mxu0 0
        %1031 = vmatpush1.bf16.msra.mxu0 0
        %1032 = vmatprep.subr.bf16.mxu0 0
        %1033 = vmatpush1.bf16.msra.mxu0 0
        %1034 = vmatprep.subr.bf16.mxu0 0
        %1035 = vmatpush1.bf16.msra.mxu0 0
        %1036 = vmatprep.subr.bf16.mxu0 0
        %1037 = vmatpush1.bf16.msra.mxu0 0
        %1038 = vmatprep.subr.bf16.mxu0 0
        %1039 = vmatpush1.bf16.msra.mxu0 0
        %1040 = vmatprep.subr.bf16.mxu0 0
        %1041 = vmatpush1.bf16.msra.mxu0 0
        %1042 = vmatprep.subr.bf16.mxu0 0
        %1043 = vmatpush1.bf16.msra.mxu0 0
        %1044 = vmatprep.subr.bf16.mxu0 0
        %1045 = vmatpush1.bf16.msra.mxu0 0
        %1046 = vmatprep.subr.bf16.mxu0 0
        %1047 = vmatpush1.bf16.msra.mxu0 0
        %1048 = vmatprep.subr.bf16.mxu0 0
        %1049 = vmatpush1.bf16.msra.mxu0 0
        %1050 = vmatprep.mubr.bf16.mxu0 0
        %1051 = vmatmul.mubr.bf16.gmra.mrb[0].mxu0 %v1016
        %v1052 = vpop.f32.mrb[0].mxu0
        %v1053 = vadd.f32 0.0, %v1052
        %v1054 = vpop.f32.mrb[0].mxu0
        %v1055 = vpop.f32.mrb[0].mxu0
        %v1056 = vpop.f32.mrb[0].mxu0
        %1057 = vdwg.mxu0
        %v1058 = vadd.f32 %v1010, %v1053
        %v1059 = vtanh.pop %v1058
        %v1060 = vxor.u32 %v1058, 2147483648
        %v1061 = vmul.f32 %v1060, 1.442695
        %v1062 = vpow.pop %v1061
        %v1063 = vadd.f32 %v1062, 1.0
        %v1064 = vrcp.pop %v1063
        %v1065 = vmul.f32 1.0, %v1064
        %v1066 = vsel %vm543, %v1059, %v1065
        %v1067 = vmul.f32 %v1066, %v1002
        %1069 = vrot.lane.b32.xlu0 %v1066, 64
        %v1070 = vpop.permute.xlu0 %1069
        %v1072 = vmul.f32 %v1066, %v1070
        %1074 = vrot.lane.b32.xlu0 %v1072, 32
        %v1075 = vpop.permute.xlu0 %1074
        %v1077 = vadd.f32 %v1067, %v1075
        %v1078 = vtanh.pop %v1077
        %1080 = vrot.lane.b32.xlu0 %v1078, 64
        %v1081 = vpop.permute.xlu0 %1080
        %v1083 = vmul.f32 %v1066, %v1081
        %s1084 = scalar_lea.vmem [#allocation4], 56
        %v1085 = vld [vmem:[%s1084] sm:$0xff]
        %v1086 = vpack.c.bf16 %v1083, %v1083
        %1088 = vrot.lane.b32.xlu0 %v1086, 32
        %v1089 = vpop.permute.xlu0 %1088
        %v1091 = vsel %vm560, %v1089, 0
        %1093 = vmatprep.subr.bf16.mxu0 0
        %1094 = vmatpush1.bf16.msra.mxu0 %v556
        %1095 = vmatprep.subr.bf16.mxu0 0
        %1096 = vmatpush1.bf16.msra.mxu0 %v557
        %1097 = vmatprep.subr.bf16.mxu0 0
        %1098 = vmatpush1.bf16.msra.mxu0 0
        %1099 = vmatprep.subr.bf16.mxu0 0
        %1100 = vmatpush1.bf16.msra.mxu0 0
        %1101 = vmatprep.subr.bf16.mxu0 0
        %1102 = vmatpush1.bf16.msra.mxu0 0
        %1103 = vmatprep.subr.bf16.mxu0 0
        %1104 = vmatpush1.bf16.msra.mxu0 0
        %1105 = vmatprep.subr.bf16.mxu0 0
        %1106 = vmatpush1.bf16.msra.mxu0 0
        %1107 = vmatprep.subr.bf16.mxu0 0
        %1108 = vmatpush1.bf16.msra.mxu0 0
        %1109 = vmatprep.subr.bf16.mxu0 0
        %1110 = vmatpush1.bf16.msra.mxu0 0
        %1111 = vmatprep.subr.bf16.mxu0 0
        %1112 = vmatpush1.bf16.msra.mxu0 0
        %1113 = vmatprep.subr.bf16.mxu0 0
        %1114 = vmatpush1.bf16.msra.mxu0 0
        %1115 = vmatprep.subr.bf16.mxu0 0
        %1116 = vmatpush1.bf16.msra.mxu0 0
        %1117 = vmatprep.subr.bf16.mxu0 0
        %1118 = vmatpush1.bf16.msra.mxu0 0
        %1119 = vmatprep.subr.bf16.mxu0 0
        %1120 = vmatpush1.bf16.msra.mxu0 0
        %1121 = vmatprep.subr.bf16.mxu0 0
        %1122 = vmatpush1.bf16.msra.mxu0 0
        %1123 = vmatprep.subr.bf16.mxu0 0
        %1124 = vmatpush1.bf16.msra.mxu0 0
        %1125 = vmatprep.mubr.bf16.mxu0 0
        %1126 = vmatmul.mubr.bf16.gmra.mrb[0].mxu0 %v1091
        %v1127 = vpop.f32.mrb[0].mxu0
        %v1128 = vadd.f32 0.0, %v1127
        %v1129 = vpop.f32.mrb[0].mxu0
        %v1130 = vpop.f32.mrb[0].mxu0
        %v1131 = vpop.f32.mrb[0].mxu0
        %1132 = vdwg.mxu0
        %v1133 = vadd.f32 %v1085, %v1128
        %v1134 = vtanh.pop %v1133
        %v1135 = vxor.u32 %v1133, 2147483648
        %v1136 = vmul.f32 %v1135, 1.442695
        %v1137 = vpow.pop %v1136
        %v1138 = vadd.f32 %v1137, 1.0
        %v1139 = vrcp.pop %v1138
        %v1140 = vmul.f32 1.0, %v1139
        %v1141 = vsel %vm543, %v1134, %v1140
        %v1142 = vmul.f32 %v1141, %v1077
        %1144 = vrot.lane.b32.xlu0 %v1141, 64
        %v1145 = vpop.permute.xlu0 %1144
        %v1147 = vmul.f32 %v1141, %v1145
        %1149 = vrot.lane.b32.xlu0 %v1147, 32
        %v1150 = vpop.permute.xlu0 %1149
        %v1152 = vadd.f32 %v1142, %v1150
        %v1153 = vtanh.pop %v1152
        %1155 = vrot.lane.b32.xlu0 %v1153, 64
        %v1156 = vpop.permute.xlu0 %1155
        %v1158 = vmul.f32 %v1141, %v1156
        %1160 = vrot.lane.b32.xlu0 %v1158, 32
        %v1161 = vpop.permute.xlu0 %1160
        %1163 = vst.msk [vmem:[#allocation2] sm:$0xff] %vm560, %v1161
        %1165 = vrot.lane.b32.xlu0 %v1152, 96
        %v1166 = vpop.permute.xlu0 %1165
        %1168 = vst.msk [vmem:[#allocation3] sm:$0xff] %vm560, %v1166
        // Predicated region
        $region57: #{siamese_lstm_final_hidden.1} parent=35 // pred_check
          %p1169 = pneg %p298
        $region58: #{siamese_lstm_final_hidden.1} parent=35 // pred_check_branch
          %1171 = sbr.rel (%p1169) target = $region60
        $region59: #{siamese_lstm_final_hidden.1} parent=35 // pred_region
          %1172 = vst.msk [vmem:[%s296] sm:$0xff] %vm560, %v1161
        $region60: #{siamese_lstm_final_hidden.1} parent=35 // pred_fallthru
          _
        %s1173 = sand.u32 %s141, 1
        %s1174 = scalar_lea.sflag [#allocation7], %s1173
        %s1175 = sand.u32 %s141, 1
        %s1176 = smul.addr %s1175, 8
        %s1177 = scalar_lea.vmem [#allocation13], %s1176
        // Predicated region
        $region61: #{siamese_lstm_final_hidden.1} parent=35 // pred_check
          %p1178 = pneg %p151
        $region62: #{siamese_lstm_final_hidden.1} parent=35 // pred_check_branch
          %1180 = sbr.rel (%p1178) target = $region64
        $region63: #{siamese_lstm_final_hidden.1} parent=35 // pred_region
          %s1182 = ssub.s32 128, 128
          %1183 = vsyncadd %s1174, %s1182
          %s1184 = smul.addr %s29, 128
          %s1185 = scalar_lea.hbm %s4, %s1184
          %s1187 = sshll.u32 %s1177, 4
          %s1188 = int_to_ptr.vmem [resolvable:$true] %s1187
          %1190 = dma.vmem_to_hbm [thread:$0]  %s1188, 128, %s1185, %s1174
        $region64: #{siamese_lstm_final_hidden.1} parent=35 // pred_fallthru
          _
      $region36: #{siamese_lstm_final_hidden.1} parent=5 // pred_fallthru
        _
      %p1191 = scmp.le.s32.totalorder 2, %s20
      // Predicated region
      $region65: #{siamese_lstm_final_hidden.1} parent=5 // pred_check
        %p1192 = pneg %p1191
      $region66: #{siamese_lstm_final_hidden.1} parent=5 // pred_check_branch
        %1194 = sbr.rel (%p1192) target = $region68
      $region67: #{siamese_lstm_final_hidden.1} parent=5 // pred_region
        %s1195 = ssub.s32 %s20, 2
        // Predicated region
        $region69: #{siamese_lstm_final_hidden.1} parent=67 // pred_check
          %p1196 = pneg %p157
        $region70: #{siamese_lstm_final_hidden.1} parent=67 // pred_check_branch
          %1198 = sbr.rel (%p1196) target = $region72
        $region71: #{siamese_lstm_final_hidden.1} parent=67 // pred_region
          %s1199 = sand.u32 %s142, 1
          %s1200 = scalar_lea.sflag [#allocation7], %s1199
          %s1201 = sand.u32 %s142, 1
          %s1202 = smul.addr %s1201, 8
          %s1203 = scalar_lea.vmem [#allocation13], %s1202
          %1204 = dma.done %s1200, 128
        $region72: #{siamese_lstm_final_hidden.1} parent=67 // pred_fallthru
          _
      $region68: #{siamese_lstm_final_hidden.1} parent=5 // pred_fallthru
        _
    $region6: #{siamese_lstm_final_hidden.1} parent=1 // loop_footer
      %s24 = sadd.s32 1, %s20
    $region7: #{siamese_lstm_final_hidden.1} parent=1 // loop_footer_branch
      %19 = sbr.rel target = $region3
    $region8: #{siamese_lstm_final_hidden.1} parent=1 // loop_exit
      _
    %1205 = vsyncpa [#allocation6], 1
    %s1206 = scalar_lea.sflag [#allocation6], 1
    %1207 = vsyncpa %s1206, 1
    %1208 = vsyncpa [#allocation9], 1
    %1209 = vsyncpa [#allocation12], 1
    %s1210 = scalar_lea.sflag [#allocation12], 1
    %1211 = vsyncpa %s1210, 1
    %1212 = vsyncpa [#allocation7], 1
    %s1213 = scalar_lea.sflag [#allocation7], 1
    %1214 = vsyncpa %s1213, 1

</llo_original>
